<compile_context>
chip_gen: v5e
topology: v5e:2x2
jax: 0.10.0
libtpu: 0.0.40
codegen_flags: <defaults>
</compile_context>

<pallas_src>
import functools

import jax
import jax.numpy as jnp
from jax.experimental import pallas as pl
from jax.experimental.pallas import tpu as pltpu

# ----- "const" stand-ins ------------------------------------------------------
PAD_TOKEN = 0
BIDIRECTIONAL = 2            # 2 => bidirectional LSTM
ENCODER_LAYERS = 2
LSTM_ENCODER_DROPOUT = 0.0   # inactive at inference
DROPOUT = 0.0                # EncoderBOW dropout, inactive at inference


def _chunk_len(T, max_chunk=32):
    """Largest divisor of T that is <= max_chunk (time steps per grid step)."""
    best = 1
    for cand in range(1, min(T, max_chunk) + 1):
        if T % cand == 0:
            best = cand
    return best


# ----- Pallas LSTM kernel: one layer, BOTH directions, Tc steps per grid step -
def _lstm_layer_kernel(gates_ref, whh_ref, out_ref, hN_ref, cN_ref,
                       h_sc, c_sc, *, chunk, hidden):
    """grid = (2, T // chunk): axis 0 = direction (parallel), axis 1 = chunk.

    gates_ref : (chunk, B, 4H) f32   precomputed x @ W_ih^T + b for this chunk
                (for d=1 the index_map walks the chunks back-to-front)
    whh_ref   : (H, 4H)        bf16  recurrent weights of this direction
    out_ref   : (chunk, B, H)  f32   per-step hidden outputs (original time order)
    hN_ref    : (B, H)         f32   final hidden state of this direction
    cN_ref    : (B, H)         f32   final cell state of this direction
    h_sc/c_sc : VMEM f32 (B,H)       recurrent carry across chunks
    """
    d = pl.program_id(0)          # direction: 0 = forward, 1 = backward
    c = pl.program_id(1)          # chunk counter (iteration order)
    H = hidden

    @pl.when(c == 0)
    def _():
        h_sc[...] = jnp.zeros_like(h_sc)
        c_sc[...] = jnp.zeros_like(c_sc)

    whh = whh_ref[...]            # (H, 4H) bf16, hoisted out of the loop
    h = h_sc[...]
    cell = c_sc[...]

    for tt in range(chunk):       # static unroll over the chunk
        # local time index: forward -> tt, backward -> chunk-1-tt (branch free)
        lt = tt + d * (chunk - 1 - 2 * tt)
        g_in = gates_ref[pl.ds(lt, 1), :, :][0]                    # (B, 4H) f32
        g = g_in + jnp.dot(h.astype(jnp.bfloat16), whh,
                           preferred_element_type=jnp.float32)     # (B, 4H) f32
        # NOTE: gate slices are not lane-aligned for H < 128; fine at demo size.
        i = jax.nn.sigmoid(g[:, 0 * H:1 * H])
        f = jax.nn.sigmoid(g[:, 1 * H:2 * H])
        gg = jnp.tanh(g[:, 2 * H:3 * H])
        o = jax.nn.sigmoid(g[:, 3 * H:4 * H])
        cell = f * cell + i * gg
        h = o * jnp.tanh(cell)
        out_ref[pl.ds(lt, 1), :, :] = h[None]                      # (1, B, H)

    h_sc[...] = h
    c_sc[...] = cell

    @pl.when(c == pl.num_programs(1) - 1)
    def _():
        hN_ref[...] = h
        cN_ref[...] = cell


def lstm_bidir_layer(gates, whh_t_bf16):
    """Run one bidirectional LSTM layer.

    gates      : (2, T, B, 4H) f32  -- per-direction x @ W_ih^T + (b_ih + b_hh)
    whh_t_bf16 : (2, H, 4H)   bf16  -- per-direction W_hh^T
    Returns (out (2, T, B, H) f32, h_final (2, B, H), c_final (2, B, H)).
    """
    _, T, B, H4 = gates.shape
    H = H4 // 4
    Tc = _chunk_len(T)
    C = T // Tc

    def g_map(d, c):
        # forward direction walks chunks 0..C-1, backward walks C-1..0
        return (d, c + d * (C - 1 - 2 * c), 0, 0)

    grid_spec = pltpu.PrefetchScalarGridSpec(
        num_scalar_prefetch=0,
        grid=(2, C),
        in_specs=[
            pl.BlockSpec((None, Tc, B, 4 * H), g_map),
            # NOTE: W_hh^T is grid-invariant per direction; at production sizes
            # single-buffer it (pipeline_mode / manual scratch DMA) and set
            # vmem_limit_bytes for v7x's 64 MiB VMEM. Defaults are fine here.
            pl.BlockSpec((None, H, 4 * H), lambda d, c: (d, 0, 0)),
        ],
        out_specs=[
            pl.BlockSpec((None, Tc, B, H), g_map),
            pl.BlockSpec((None, B, H), lambda d, c: (d, 0, 0)),
            pl.BlockSpec((None, B, H), lambda d, c: (d, 0, 0)),
        ],
        scratch_shapes=[
            pltpu.VMEM((B, H), jnp.float32),   # h carry
            pltpu.VMEM((B, H), jnp.float32),   # c carry
        ],
    )

    kernel = functools.partial(_lstm_layer_kernel, chunk=Tc, hidden=H)
    return pl.pallas_call(
        kernel,
        out_shape=(
            jax.ShapeDtypeStruct((2, T, B, H), jnp.float32),   # per-step outputs
            jax.ShapeDtypeStruct((2, B, H), jnp.float32),      # final h per dir
            jax.ShapeDtypeStruct((2, B, H), jnp.float32),      # final c per dir
        ),
        grid_spec=grid_spec,
        compiler_params=pltpu.CompilerParams(
            # direction axis is data-independent -> "parallel" (v7x: 2 TCs);
            # chunk axis carries the recurrence -> "arbitrary".
            dimension_semantics=("parallel", "arbitrary")),
    )(gates, whh_t_bf16)


# ----- EncoderRNN forward -----------------------------------------------------
def encoder_rnn_forward(embedding, lstm_params, input_ids, lengths=None):
    """EncoderRNN.forward (batch_first). input_ids: (B, T) int32.

    Returns (output (B, T, 2H) f32, (h_n, c_n) each (2*layers, B, H) f32).
    """
    # TODO(synk): lengths / pack_padded_sequence path unsupported; lengths=None.
    del lengths
    H = embedding.shape[1]
    # gather directly in time-major order -> (T, B, H): no activation transpose
    x = jnp.take(embedding, input_ids.T, axis=0)

    h_finals, c_finals = [], []
    out_f = out_b = None
    for layer, p in enumerate(lstm_params):
        wih_t = jnp.transpose(p["w_ih"], (0, 2, 1)).astype(jnp.bfloat16)  # (2,Din,4H)
        whh_t = jnp.transpose(p["w_hh"], (0, 2, 1)).astype(jnp.bfloat16)  # (2,H,4H)
        bias = (p["b_ih"] + p["b_hh"]).astype(jnp.float32)                # (2,4H)

        # hoisted input projection: one whole-sequence bf16 matmul (f32 acc)
        if layer == 0:
            gates = jnp.einsum("tbh,dhk->dtbk", x.astype(jnp.bfloat16), wih_t,
                               preferred_element_type=jnp.float32)
        else:
            # consume the two direction outputs directly (no concat pass):
            # rows [0:H) of W_ih^T multiply the forward output, [H:2H) backward.
            gates = (jnp.einsum("tbh,dhk->dtbk", out_f.astype(jnp.bfloat16),
                                wih_t[:, :H, :],
                                preferred_element_type=jnp.float32)
                     + jnp.einsum("tbh,dhk->dtbk", out_b.astype(jnp.bfloat16),
                                  wih_t[:, H:, :],
                                  preferred_element_type=jnp.float32))
        gates = gates + bias[:, None, None, :]                            # (2,T,B,4H)

        outs, h_f, c_f = lstm_bidir_layer(gates, whh_t)
        out_f, out_b = outs[0], outs[1]
        h_finals.append(h_f)
        c_finals.append(c_f)
        # inter-layer dropout (LSTM_ENCODER_DROPOUT) is inactive at inference.

    output = jnp.transpose(jnp.concatenate([out_f, out_b], axis=-1), (1, 0, 2))
    h_n = jnp.concatenate(h_finals, axis=0)   # (2*layers, B, H), layer-major
    c_n = jnp.concatenate(c_finals, axis=0)
    return output, (h_n, c_n)


# ----- fusion MLP Pallas kernel -----------------------------------------------
def _fusion_kernel(seq_ref, name_ref, tok_ref,
                   wseq_ref, wname_ref, wtok_ref, wfus_ref,
                   bseq_ref, bname_ref, btok_ref, bfus_ref, out_ref):
    pre = (jnp.dot(seq_ref[...], wseq_ref[...], preferred_element_type=jnp.float32)
           + bseq_ref[...]
           + jnp.dot(name_ref[...], wname_ref[...], preferred_element_type=jnp.float32)
           + bname_ref[...]
           + jnp.dot(tok_ref[...], wtok_ref[...], preferred_element_type=jnp.float32)
           + btok_ref[...])
    pre = jnp.tanh(pre)
    out_ref[...] = (jnp.dot(pre, wfus_ref[...], preferred_element_type=jnp.float32)
                    + bfus_ref[...])


def fusion_forward(seq_embed, name_embed, tok_embed, params):
    """fusion(tanh(w_seq(seq) + w_name(name) + w_tok(tok))) as one Pallas call."""
    DL, B, H = seq_embed.shape
    seq2 = seq_embed.reshape(DL * B, H)
    name2 = name_embed.reshape(DL * B, H)
    tok2 = jnp.broadcast_to(tok_embed[None], (DL, B, H)).reshape(DL * B, H)
    inputs = [
        seq2, name2, tok2,
        params["w_seq"]["w"].T, params["w_name"]["w"].T,
        params["w_tok"]["w"].T, params["fusion"]["w"].T,
        params["w_seq"]["b"][None], params["w_name"]["b"][None],
        params["w_tok"]["b"][None], params["fusion"]["b"][None],
    ]
    in_specs = [pl.BlockSpec(a.shape, lambda i, n=a.ndim: (0,) * n) for a in inputs]
    out = pl.pallas_call(
        _fusion_kernel,
        out_shape=jax.ShapeDtypeStruct((DL * B, H), jnp.float32),
        grid_spec=pltpu.PrefetchScalarGridSpec(
            num_scalar_prefetch=0, grid=(1,),
            in_specs=in_specs,
            out_specs=pl.BlockSpec((DL * B, H), lambda i: (0, 0))),
    )(*inputs)
    return out.reshape(DL, B, H)


# ----- CodeEncoder forward ----------------------------------------------------
def code_encoder_forward(params, code_seqs, code_seq_lengths,
                         methode_names, methode_name_length,
                         code_tokens, code_tokens_length, simple=False):
    """CodeEncoder.forward -> (None, (embed, None)), like the PyTorch module."""
    # TODO(synk): the *_length arguments trigger pack_padded_sequence in PyTorch;
    # packing has no clean Pallas equivalent, so they are ignored (lengths=None).
    del code_seq_lengths, methode_name_length, code_tokens_length
    emb = params["embedding"]
    _, (seq_embed, _) = encoder_rnn_forward(emb, params["seq_lstm"], code_seqs)
    if simple:
        return None, (seq_embed, None)
    _, (name_embed, _) = encoder_rnn_forward(emb, params["name_lstm"], methode_names)
    # EncoderBOW: embedding -> dropout (inactive at inference) -> max over time
    tok_embed = jnp.max(jnp.take(emb, code_tokens, axis=0), axis=1)       # (B, H)
    embed = fusion_forward(seq_embed, name_embed, tok_embed, params)
    return None, (embed, None)


# ----- deterministic parameter init (mimics nn.Embedding / nn.LSTM / nn.Linear)
def init_params(key, vocab_size, hidden_size):
    H = hidden_size
    k_emb, k_seq, k_name, k_fuse = jax.random.split(key, 4)
    emb = jax.random.normal(k_emb, (vocab_size, H), jnp.float32)
    emb = emb.at[PAD_TOKEN].set(0.0)          # padding_idx row is zero
    bound = 1.0 / (H ** 0.5)

    def uni(k, shape):
        return jax.random.uniform(k, shape, jnp.float32, -bound, bound)

    def lstm_stack(k):
        layers = []
        kk = jax.random.split(k, ENCODER_LAYERS * 4)
        idx = 0
        for layer in range(ENCODER_LAYERS):
            in_dim = H if layer == 0 else BIDIRECTIONAL * H
            layers.append({
                "w_ih": uni(kk[idx + 0], (BIDIRECTIONAL, 4 * H, in_dim)),
                "w_hh": uni(kk[idx + 1], (BIDIRECTIONAL, 4 * H, H)),
                "b_ih": uni(kk[idx + 2], (BIDIRECTIONAL, 4 * H)),
                "b_hh": uni(kk[idx + 3], (BIDIRECTIONAL, 4 * H)),
            })
            idx += 4
        return layers

    def linear(k):
        k1, k2 = jax.random.split(k)
        return {"w": uni(k1, (H, H)), "b": uni(k2, (H,))}

    kf = jax.random.split(k_fuse, 4)
    return {
        "embedding": emb,
        "seq_lstm": lstm_stack(k_seq),
        "name_lstm": lstm_stack(k_name),
        "w_seq": linear(kf[0]), "w_name": linear(kf[1]),
        "w_tok": linear(kf[2]), "fusion": linear(kf[3]),
    }


# ----- pure-JAX f32 reference (correctness checking) --------------------------
def _ref_lstm_dir(x_tbd, w_ih, w_hh, b_ih, b_hh):
    H = w_hh.shape[1]
    wih_t, whh_t = w_ih.T, w_hh.T
    b = b_ih + b_hh

    def step(carry, x_t):
        h, c = carry
        gates = x_t @ wih_t + h @ whh_t + b
        i = jax.nn.sigmoid(gates[:, 0 * H:1 * H])
        f = jax.nn.sigmoid(gates[:, 1 * H:2 * H])
        g = jnp.tanh(gates[:, 2 * H:3 * H])
        o = jax.nn.sigmoid(gates[:, 3 * H:4 * H])
        c = f * c + i * g
        h = o * jnp.tanh(c)
        return (h, c), h

    B = x_tbd.shape[1]
    init = (jnp.zeros((B, H), jnp.float32), jnp.zeros((B, H), jnp.float32))
    (h_f, c_f), outs = jax.lax.scan(step, init, x_tbd)
    return outs, h_f, c_f


def encoder_rnn_reference(embedding, lstm_params, input_ids):
    x = jnp.transpose(jnp.take(embedding, input_ids, axis=0), (1, 0, 2))
    h_fin, c_fin = [], []
    layer_in = x
    for p in lstm_params:
        outs_d = []
        for d in range(BIDIRECTIONAL):
            inp = layer_in if d == 0 else layer_in[::-1]
            out, h, c = _ref_lstm_dir(inp, p["w_ih"][d], p["w_hh"][d],
                                      p["b_ih"][d], p["b_hh"][d])
            if d == 1:
                out = out[::-1]
            outs_d.append(out)
            h_fin.append(h)
            c_fin.append(c)
        layer_in = jnp.concatenate(outs_d, axis=-1)
    return (jnp.transpose(layer_in, (1, 0, 2)),
            (jnp.stack(h_fin, 0), jnp.stack(c_fin, 0)))


def code_encoder_reference(params, code_seqs, methode_names, code_tokens):
    emb = params["embedding"]
    _, (seq_h, _) = encoder_rnn_reference(emb, params["seq_lstm"], code_seqs)
    _, (name_h, _) = encoder_rnn_reference(emb, params["name_lstm"], methode_names)
    tok = jnp.max(jnp.take(emb, code_tokens, axis=0), axis=1)
    lin = lambda p, x: x @ p["w"].T + p["b"]
    pre = jnp.tanh(lin(params["w_seq"], seq_h) + lin(params["w_name"], name_h)
                   + lin(params["w_tok"], tok))
    return None, (lin(params["fusion"], pre), None)


def _check(name, got, want, atol):
    err = float(jnp.max(jnp.abs(got - want)))
    assert err <= atol, f"{name} mismatch: max abs err {err:.4e} > {atol}"


if __name__ == "__main__":
    key = jax.random.PRNGKey(0)
    vocab_size = 50
    hidden_size = 32
    batch_size = 2
    T_seq, T_name, T_tok = 8, 4, 12

    pkey, k1, k2, k3 = jax.random.split(key, 4)
    params = init_params(pkey, vocab_size, hidden_size)
    code_seqs = jax.random.randint(k1, (batch_size, T_seq), 1, vocab_size,
                                   dtype=jnp.int32)
    methode_names = jax.random.randint(k2, (batch_size, T_name), 1, vocab_size,
                                       dtype=jnp.int32)
    code_tokens = jax.random.randint(k3, (batch_size, T_tok), 1, vocab_size,
                                     dtype=jnp.int32)

    # full CodeEncoder forward (simple=False path)
    _, (embed, _) = code_encoder_forward(params, code_seqs, None,
                                         methode_names, None,
                                         code_tokens, None)
    # also exercise the EncoderRNN output/hidden path directly
    seq_out, (seq_h, seq_c) = encoder_rnn_forward(
        params["embedding"], params["seq_lstm"], code_seqs)
    jax.block_until_ready((embed, seq_out, seq_h, seq_c))

    # correctness vs. pure-f32 JAX reference (kernel uses bf16 MXU weights,
    # f32 accumulation -> loose tolerance)
    TOL = 5e-2
    _, (ref_embed, _) = code_encoder_reference(params, code_seqs,
                                               methode_names, code_tokens)
    ref_out, (ref_h, ref_c) = encoder_rnn_reference(
        params["embedding"], params["seq_lstm"], code_seqs)

    assert embed.shape == (BIDIRECTIONAL * ENCODER_LAYERS, batch_size, hidden_size)
    assert seq_out.shape == (batch_size, T_seq, BIDIRECTIONAL * hidden_size)
    assert seq_h.shape == (BIDIRECTIONAL * ENCODER_LAYERS, batch_size, hidden_size)
    _check("encoder output", seq_out, ref_out, TOL)
    _check("h_n", seq_h, ref_h, TOL)
    _check("c_n", seq_c, ref_c, TOL)
    _check("fused embed", embed, ref_embed, TOL)

    print("KERNEL_OK")
</pallas_src>

<mosaic_0001>
module attributes {stable_mosaic.version = 11 : i64} {
  func.func @_lstm_layer_kernel(%arg0: i32, %arg1: i32, %arg2: memref<1x8x2x128xf32, #tpu.memory_space<vmem>>, %arg3: memref<1x32x128xbf16, #tpu.memory_space<vmem>>, %arg4: memref<1x8x2x32xf32, #tpu.memory_space<vmem>>, %arg5: memref<1x2x32xf32, #tpu.memory_space<vmem>>, %arg6: memref<1x2x32xf32, #tpu.memory_space<vmem>>, %arg7: memref<2x32xf32, #tpu.memory_space<vmem>>, %arg8: memref<2x32xf32, #tpu.memory_space<vmem>>) attributes {dimension_semantics = [#tpu.dimension_semantics<parallel>, #tpu.dimension_semantics<arbitrary>], iteration_bounds = array<i64: 2, 1>, scalar_prefetch = 0 : i64, scratch_operands = 2 : i64, tpu.core_type = #tpu.core_type<tc>, window_params = [{transform_indices = @transform_0, window_bounds = array<i64: 1, 8, 2, 128>}, {transform_indices = @transform_1, window_bounds = array<i64: 1, 32, 128>}, {transform_indices = @transform_2, window_bounds = array<i64: 1, 8, 2, 32>}, {transform_indices = @transform_3, window_bounds = array<i64: 1, 2, 32>}, {transform_indices = @transform_4, window_bounds = array<i64: 1, 2, 32>}]} {
    %c0_i32 = arith.constant 0 : i32
    %0 = arith.cmpi eq, %arg1, %c0_i32 : i32
    %1 = arith.extui %0 : i1 to i32
    %c0_i32_0 = arith.constant 0 : i32
    %2 = arith.cmpi ne, %1, %c0_i32_0 : i32
    scf.if %2 {
      %cst_97 = arith.constant 0.000000e+00 : f32
      %324 = vector.broadcast %cst_97 : f32 to vector<2x32xf32>
      %c0_98 = arith.constant 0 : index
      %c0_99 = arith.constant 0 : index
      %325 = vector.load %arg7[%c0_98, %c0_99] : memref<2x32xf32, #tpu.memory_space<vmem>>, vector<2x32xf32>
      tpu.vector_store %arg7[%c0_98, %c0_99], %324 {strides = array<i32>} : memref<2x32xf32, #tpu.memory_space<vmem>>, vector<2x32xf32>,
      %cst_100 = arith.constant 0.000000e+00 : f32
      %326 = vector.broadcast %cst_100 : f32 to vector<2x32xf32>
      %c0_101 = arith.constant 0 : index
      %c0_102 = arith.constant 0 : index
      %327 = vector.load %arg8[%c0_101, %c0_102] : memref<2x32xf32, #tpu.memory_space<vmem>>, vector<2x32xf32>
      tpu.vector_store %arg8[%c0_101, %c0_102], %326 {strides = array<i32>} : memref<2x32xf32, #tpu.memory_space<vmem>>, vector<2x32xf32>,
    } else {
    }
    %c0 = arith.constant 0 : index
    %c0_1 = arith.constant 0 : index
    %c0_2 = arith.constant 0 : index
    %3 = vector.load %arg3[%c0, %c0_1, %c0_2] : memref<1x32x128xbf16, #tpu.memory_space<vmem>>, vector<1x32x128xbf16>
    %4 = vector.shape_cast %3 : vector<1x32x128xbf16> to vector<32x128xbf16>
    %c0_3 = arith.constant 0 : index
    %c0_4 = arith.constant 0 : index
    %5 = vector.load %arg7[%c0_3, %c0_4] : memref<2x32xf32, #tpu.memory_space<vmem>>, vector<2x32xf32>
    %c0_5 = arith.constant 0 : index
    %c0_6 = arith.constant 0 : index
    %6 = vector.load %arg8[%c0_5, %c0_6] : memref<2x32xf32, #tpu.memory_space<vmem>>, vector<2x32xf32>
    %c7_i32 = arith.constant 7 : i32
    %7 = arith.muli %arg0, %c7_i32 : i32
    %c0_i32_7 = arith.constant 0 : i32
    %8 = arith.addi %c0_i32_7, %7 : i32
    %c0_8 = arith.constant 0 : index
    %9 = arith.index_cast %8 : i32 to index
    %c0_9 = arith.constant 0 : index
    %c0_10 = arith.constant 0 : index
    %10 = vector.load %arg2[%c0_8, %9, %c0_9, %c0_10] : memref<1x8x2x128xf32, #tpu.memory_space<vmem>>, vector<1x1x2x128xf32>
    %11 = vector.shape_cast %10 : vector<1x1x2x128xf32> to vector<1x2x128xf32>
    %12 = vector.shape_cast %11 : vector<1x2x128xf32> to vector<2x128xf32>
    %13 = arith.truncf %5 : vector<2x32xf32> to vector<2x32xbf16>
    %cst = arith.constant dense<0.000000e+00> : vector<2x128xf32>
    %14 = tpu.matmul %13, %4, %cst {dimension_numbers = #tpu.dot_dimension_numbers<[1], [0], [0], [1], [0, 0, 1, 1], [], []>} : vector<2x32xbf16>, vector<32x128xbf16>, vector<2x128xf32> -> vector<2x128xf32>
    %15 = arith.addf %12, %14 : vector<2x128xf32>
    %16 = vector.extract_strided_slice %15 {offsets = [0, 0], sizes = [2, 32], strides = [1, 1]} : vector<2x128xf32> to vector<2x32xf32>
    %17 = arith.negf %16 : vector<2x32xf32>
    %18 = math.exp %17 : vector<2x32xf32>
    %cst_11 = arith.constant 1.000000e+00 : f32
    %19 = vector.broadcast %cst_11 : f32 to vector<2x32xf32>
    %20 = arith.addf %19, %18 : vector<2x32xf32>
    %21 = arith.divf %19, %20 : vector<2x32xf32>
    %22 = vector.extract_strided_slice %15 {offsets = [0, 32], sizes = [2, 32], strides = [1, 1]} : vector<2x128xf32> to vector<2x32xf32>
    %23 = arith.negf %22 : vector<2x32xf32>
    %24 = math.exp %23 : vector<2x32xf32>
    %cst_12 = arith.constant 1.000000e+00 : f32
    %25 = vector.broadcast %cst_12 : f32 to vector<2x32xf32>
    %26 = arith.addf %25, %24 : vector<2x32xf32>
    %27 = arith.divf %25, %26 : vector<2x32xf32>
    %28 = vector.extract_strided_slice %15 {offsets = [0, 64], sizes = [2, 32], strides = [1, 1]} : vector<2x128xf32> to vector<2x32xf32>
    %29 = math.tanh %28 : vector<2x32xf32>
    %30 = vector.extract_strided_slice %15 {offsets = [0, 96], sizes = [2, 32], strides = [1, 1]} : vector<2x128xf32> to vector<2x32xf32>
    %31 = arith.negf %30 : vector<2x32xf32>
    %32 = math.exp %31 : vector<2x32xf32>
    %cst_13 = arith.constant 1.000000e+00 : f32
    %33 = vector.broadcast %cst_13 : f32 to vector<2x32xf32>
    %34 = arith.addf %33, %32 : vector<2x32xf32>
    %35 = arith.divf %33, %34 : vector<2x32xf32>
    %36 = arith.mulf %27, %6 : vector<2x32xf32>
    %37 = arith.mulf %21, %29 : vector<2x32xf32>
    %38 = arith.addf %36, %37 : vector<2x32xf32>
    %39 = math.tanh %38 : vector<2x32xf32>
    %40 = arith.mulf %35, %39 : vector<2x32xf32>
    %41 = vector.shape_cast %40 : vector<2x32xf32> to vector<1x2x32xf32>
    %c0_14 = arith.constant 0 : index
    %42 = arith.index_cast %8 : i32 to index
    %c0_15 = arith.constant 0 : index
    %c0_16 = arith.constant 0 : index
    %43 = vector.load %arg4[%c0_14, %42, %c0_15, %c0_16] : memref<1x8x2x32xf32, #tpu.memory_space<vmem>>, vector<1x1x2x32xf32>
    %44 = vector.shape_cast %43 : vector<1x1x2x32xf32> to vector<1x2x32xf32>
    %45 = vector.shape_cast %41 : vector<1x2x32xf32> to vector<1x1x2x32xf32>
    tpu.vector_store %arg4[%c0_14, %42, %c0_15, %c0_16], %45 {strides = array<i32>} : memref<1x8x2x32xf32, #tpu.memory_space<vmem>>, vector<1x1x2x32xf32>,
    %c5_i32 = arith.constant 5 : i32
    %46 = arith.muli %arg0, %c5_i32 : i32
    %c1_i32 = arith.constant 1 : i32
    %47 = arith.addi %c1_i32, %46 : i32
    %c0_17 = arith.constant 0 : index
    %48 = arith.index_cast %47 : i32 to index
    %c0_18 = arith.constant 0 : index
    %c0_19 = arith.constant 0 : index
    %49 = vector.load %arg2[%c0_17, %48, %c0_18, %c0_19] : memref<1x8x2x128xf32, #tpu.memory_space<vmem>>, vector<1x1x2x128xf32>
    %50 = vector.shape_cast %49 : vector<1x1x2x128xf32> to vector<1x2x128xf32>
    %51 = vector.shape_cast %50 : vector<1x2x128xf32> to vector<2x128xf32>
    %52 = arith.truncf %40 : vector<2x32xf32> to vector<2x32xbf16>
    %cst_20 = arith.constant dense<0.000000e+00> : vector<2x128xf32>
    %53 = tpu.matmul %52, %4, %cst_20 {dimension_numbers = #tpu.dot_dimension_numbers<[1], [0], [0], [1], [0, 0, 1, 1], [], []>} : vector<2x32xbf16>, vector<32x128xbf16>, vector<2x128xf32> -> vector<2x128xf32>
    %54 = arith.addf %51, %53 : vector<2x128xf32>
    %55 = vector.extract_strided_slice %54 {offsets = [0, 0], sizes = [2, 32], strides = [1, 1]} : vector<2x128xf32> to vector<2x32xf32>
    %56 = arith.negf %55 : vector<2x32xf32>
    %57 = math.exp %56 : vector<2x32xf32>
    %cst_21 = arith.constant 1.000000e+00 : f32
    %58 = vector.broadcast %cst_21 : f32 to vector<2x32xf32>
    %59 = arith.addf %58, %57 : vector<2x32xf32>
    %60 = arith.divf %58, %59 : vector<2x32xf32>
    %61 = vector.extract_strided_slice %54 {offsets = [0, 32], sizes = [2, 32], strides = [1, 1]} : vector<2x128xf32> to vector<2x32xf32>
    %62 = arith.negf %61 : vector<2x32xf32>
    %63 = math.exp %62 : vector<2x32xf32>
    %cst_22 = arith.constant 1.000000e+00 : f32
    %64 = vector.broadcast %cst_22 : f32 to vector<2x32xf32>
    %65 = arith.addf %64, %63 : vector<2x32xf32>
    %66 = arith.divf %64, %65 : vector<2x32xf32>
    %67 = vector.extract_strided_slice %54 {offsets = [0, 64], sizes = [2, 32], strides = [1, 1]} : vector<2x128xf32> to vector<2x32xf32>
    %68 = math.tanh %67 : vector<2x32xf32>
    %69 = vector.extract_strided_slice %54 {offsets = [0, 96], sizes = [2, 32], strides = [1, 1]} : vector<2x128xf32> to vector<2x32xf32>
    %70 = arith.negf %69 : vector<2x32xf32>
    %71 = math.exp %70 : vector<2x32xf32>
    %cst_23 = arith.constant 1.000000e+00 : f32
    %72 = vector.broadcast %cst_23 : f32 to vector<2x32xf32>
    %73 = arith.addf %72, %71 : vector<2x32xf32>
    %74 = arith.divf %72, %73 : vector<2x32xf32>
    %75 = arith.mulf %66, %38 : vector<2x32xf32>
    %76 = arith.mulf %60, %68 : vector<2x32xf32>
    %77 = arith.addf %75, %76 : vector<2x32xf32>
    %78 = math.tanh %77 : vector<2x32xf32>
    %79 = arith.mulf %74, %78 : vector<2x32xf32>
    %80 = vector.shape_cast %79 : vector<2x32xf32> to vector<1x2x32xf32>
    %c0_24 = arith.constant 0 : index
    %81 = arith.index_cast %47 : i32 to index
    %c0_25 = arith.constant 0 : index
    %c0_26 = arith.constant 0 : index
    %82 = vector.load %arg4[%c0_24, %81, %c0_25, %c0_26] : memref<1x8x2x32xf32, #tpu.memory_space<vmem>>, vector<1x1x2x32xf32>
    %83 = vector.shape_cast %82 : vector<1x1x2x32xf32> to vector<1x2x32xf32>
    %84 = vector.shape_cast %80 : vector<1x2x32xf32> to vector<1x1x2x32xf32>
    tpu.vector_store %arg4[%c0_24, %81, %c0_25, %c0_26], %84 {strides = array<i32>} : memref<1x8x2x32xf32, #tpu.memory_space<vmem>>, vector<1x1x2x32xf32>,
    %c3_i32 = arith.constant 3 : i32
    %85 = arith.muli %arg0, %c3_i32 : i32
    %c2_i32 = arith.constant 2 : i32
    %86 = arith.addi %c2_i32, %85 : i32
    %c0_27 = arith.constant 0 : index
    %87 = arith.index_cast %86 : i32 to index
    %c0_28 = arith.constant 0 : index
    %c0_29 = arith.constant 0 : index
    %88 = vector.load %arg2[%c0_27, %87, %c0_28, %c0_29] : memref<1x8x2x128xf32, #tpu.memory_space<vmem>>, vector<1x1x2x128xf32>
    %89 = vector.shape_cast %88 : vector<1x1x2x128xf32> to vector<1x2x128xf32>
    %90 = vector.shape_cast %89 : vector<1x2x128xf32> to vector<2x128xf32>
    %91 = arith.truncf %79 : vector<2x32xf32> to vector<2x32xbf16>
    %cst_30 = arith.constant dense<0.000000e+00> : vector<2x128xf32>
    %92 = tpu.matmul %91, %4, %cst_30 {dimension_numbers = #tpu.dot_dimension_numbers<[1], [0], [0], [1], [0, 0, 1, 1], [], []>} : vector<2x32xbf16>, vector<32x128xbf16>, vector<2x128xf32> -> vector<2x128xf32>
    %93 = arith.addf %90, %92 : vector<2x128xf32>
    %94 = vector.extract_strided_slice %93 {offsets = [0, 0], sizes = [2, 32], strides = [1, 1]} : vector<2x128xf32> to vector<2x32xf32>
    %95 = arith.negf %94 : vector<2x32xf32>
    %96 = math.exp %95 : vector<2x32xf32>
    %cst_31 = arith.constant 1.000000e+00 : f32
    %97 = vector.broadcast %cst_31 : f32 to vector<2x32xf32>
    %98 = arith.addf %97, %96 : vector<2x32xf32>
    %99 = arith.divf %97, %98 : vector<2x32xf32>
    %100 = vector.extract_strided_slice %93 {offsets = [0, 32], sizes = [2, 32], strides = [1, 1]} : vector<2x128xf32> to vector<2x32xf32>
    %101 = arith.negf %100 : vector<2x32xf32>
    %102 = math.exp %101 : vector<2x32xf32>
    %cst_32 = arith.constant 1.000000e+00 : f32
    %103 = vector.broadcast %cst_32 : f32 to vector<2x32xf32>
    %104 = arith.addf %103, %102 : vector<2x32xf32>
    %105 = arith.divf %103, %104 : vector<2x32xf32>
    %106 = vector.extract_strided_slice %93 {offsets = [0, 64], sizes = [2, 32], strides = [1, 1]} : vector<2x128xf32> to vector<2x32xf32>
    %107 = math.tanh %106 : vector<2x32xf32>
    %108 = vector.extract_strided_slice %93 {offsets = [0, 96], sizes = [2, 32], strides = [1, 1]} : vector<2x128xf32> to vector<2x32xf32>
    %109 = arith.negf %108 : vector<2x32xf32>
    %110 = math.exp %109 : vector<2x32xf32>
    %cst_33 = arith.constant 1.000000e+00 : f32
    %111 = vector.broadcast %cst_33 : f32 to vector<2x32xf32>
    %112 = arith.addf %111, %110 : vector<2x32xf32>
    %113 = arith.divf %111, %112 : vector<2x32xf32>
    %114 = arith.mulf %105, %77 : vector<2x32xf32>
    %115 = arith.mulf %99, %107 : vector<2x32xf32>
    %116 = arith.addf %114, %115 : vector<2x32xf32>
    %117 = math.tanh %116 : vector<2x32xf32>
    %118 = arith.mulf %113, %117 : vector<2x32xf32>
    %119 = vector.shape_cast %118 : vector<2x32xf32> to vector<1x2x32xf32>
    %c0_34 = arith.constant 0 : index
    %120 = arith.index_cast %86 : i32 to index
    %c0_35 = arith.constant 0 : index
    %c0_36 = arith.constant 0 : index
    %121 = vector.load %arg4[%c0_34, %120, %c0_35, %c0_36] : memref<1x8x2x32xf32, #tpu.memory_space<vmem>>, vector<1x1x2x32xf32>
    %122 = vector.shape_cast %121 : vector<1x1x2x32xf32> to vector<1x2x32xf32>
    %123 = vector.shape_cast %119 : vector<1x2x32xf32> to vector<1x1x2x32xf32>
    tpu.vector_store %arg4[%c0_34, %120, %c0_35, %c0_36], %123 {strides = array<i32>} : memref<1x8x2x32xf32, #tpu.memory_space<vmem>>, vector<1x1x2x32xf32>,
    %c1_i32_37 = arith.constant 1 : i32
    %124 = arith.muli %arg0, %c1_i32_37 : i32
    %c3_i32_38 = arith.constant 3 : i32
    %125 = arith.addi %c3_i32_38, %124 : i32
    %c0_39 = arith.constant 0 : index
    %126 = arith.index_cast %125 : i32 to index
    %c0_40 = arith.constant 0 : index
    %c0_41 = arith.constant 0 : index
    %127 = vector.load %arg2[%c0_39, %126, %c0_40, %c0_41] : memref<1x8x2x128xf32, #tpu.memory_space<vmem>>, vector<1x1x2x128xf32>
    %128 = vector.shape_cast %127 : vector<1x1x2x128xf32> to vector<1x2x128xf32>
    %129 = vector.shape_cast %128 : vector<1x2x128xf32> to vector<2x128xf32>
    %130 = arith.truncf %118 : vector<2x32xf32> to vector<2x32xbf16>
    %cst_42 = arith.constant dense<0.000000e+00> : vector<2x128xf32>
    %131 = tpu.matmul %130, %4, %cst_42 {dimension_numbers = #tpu.dot_dimension_numbers<[1], [0], [0], [1], [0, 0, 1, 1], [], []>} : vector<2x32xbf16>, vector<32x128xbf16>, vector<2x128xf32> -> vector<2x128xf32>
    %132 = arith.addf %129, %131 : vector<2x128xf32>
    %133 = vector.extract_strided_slice %132 {offsets = [0, 0], sizes = [2, 32], strides = [1, 1]} : vector<2x128xf32> to vector<2x32xf32>
    %134 = arith.negf %133 : vector<2x32xf32>
    %135 = math.exp %134 : vector<2x32xf32>
    %cst_43 = arith.constant 1.000000e+00 : f32
    %136 = vector.broadcast %cst_43 : f32 to vector<2x32xf32>
    %137 = arith.addf %136, %135 : vector<2x32xf32>
    %138 = arith.divf %136, %137 : vector<2x32xf32>
    %139 = vector.extract_strided_slice %132 {offsets = [0, 32], sizes = [2, 32], strides = [1, 1]} : vector<2x128xf32> to vector<2x32xf32>
    %140 = arith.negf %139 : vector<2x32xf32>
    %141 = math.exp %140 : vector<2x32xf32>
    %cst_44 = arith.constant 1.000000e+00 : f32
    %142 = vector.broadcast %cst_44 : f32 to vector<2x32xf32>
    %143 = arith.addf %142, %141 : vector<2x32xf32>
    %144 = arith.divf %142, %143 : vector<2x32xf32>
    %145 = vector.extract_strided_slice %132 {offsets = [0, 64], sizes = [2, 32], strides = [1, 1]} : vector<2x128xf32> to vector<2x32xf32>
    %146 = math.tanh %145 : vector<2x32xf32>
    %147 = vector.extract_strided_slice %132 {offsets = [0, 96], sizes = [2, 32], strides = [1, 1]} : vector<2x128xf32> to vector<2x32xf32>
    %148 = arith.negf %147 : vector<2x32xf32>
    %149 = math.exp %148 : vector<2x32xf32>
    %cst_45 = arith.constant 1.000000e+00 : f32
    %150 = vector.broadcast %cst_45 : f32 to vector<2x32xf32>
    %151 = arith.addf %150, %149 : vector<2x32xf32>
    %152 = arith.divf %150, %151 : vector<2x32xf32>
    %153 = arith.mulf %144, %116 : vector<2x32xf32>
    %154 = arith.mulf %138, %146 : vector<2x32xf32>
    %155 = arith.addf %153, %154 : vector<2x32xf32>
    %156 = math.tanh %155 : vector<2x32xf32>
    %157 = arith.mulf %152, %156 : vector<2x32xf32>
    %158 = vector.shape_cast %157 : vector<2x32xf32> to vector<1x2x32xf32>
    %c0_46 = arith.constant 0 : index
    %159 = arith.index_cast %125 : i32 to index
    %c0_47 = arith.constant 0 : index
    %c0_48 = arith.constant 0 : index
    %160 = vector.load %arg4[%c0_46, %159, %c0_47, %c0_48] : memref<1x8x2x32xf32, #tpu.memory_space<vmem>>, vector<1x1x2x32xf32>
    %161 = vector.shape_cast %160 : vector<1x1x2x32xf32> to vector<1x2x32xf32>
    %162 = vector.shape_cast %158 : vector<1x2x32xf32> to vector<1x1x2x32xf32>
    tpu.vector_store %arg4[%c0_46, %159, %c0_47, %c0_48], %162 {strides = array<i32>} : memref<1x8x2x32xf32, #tpu.memory_space<vmem>>, vector<1x1x2x32xf32>,
    %c-1_i32 = arith.constant -1 : i32
    %163 = arith.muli %arg0, %c-1_i32 : i32
    %c4_i32 = arith.constant 4 : i32
    %164 = arith.addi %c4_i32, %163 : i32
    %c0_49 = arith.constant 0 : index
    %165 = arith.index_cast %164 : i32 to index
    %c0_50 = arith.constant 0 : index
    %c0_51 = arith.constant 0 : index
    %166 = vector.load %arg2[%c0_49, %165, %c0_50, %c0_51] : memref<1x8x2x128xf32, #tpu.memory_space<vmem>>, vector<1x1x2x128xf32>
    %167 = vector.shape_cast %166 : vector<1x1x2x128xf32> to vector<1x2x128xf32>
    %168 = vector.shape_cast %167 : vector<1x2x128xf32> to vector<2x128xf32>
    %169 = arith.truncf %157 : vector<2x32xf32> to vector<2x32xbf16>
    %cst_52 = arith.constant dense<0.000000e+00> : vector<2x128xf32>
    %170 = tpu.matmul %169, %4, %cst_52 {dimension_numbers = #tpu.dot_dimension_numbers<[1], [0], [0], [1], [0, 0, 1, 1], [], []>} : vector<2x32xbf16>, vector<32x128xbf16>, vector<2x128xf32> -> vector<2x128xf32>
    %171 = arith.addf %168, %170 : vector<2x128xf32>
    %172 = vector.extract_strided_slice %171 {offsets = [0, 0], sizes = [2, 32], strides = [1, 1]} : vector<2x128xf32> to vector<2x32xf32>
    %173 = arith.negf %172 : vector<2x32xf32>
    %174 = math.exp %173 : vector<2x32xf32>
    %cst_53 = arith.constant 1.000000e+00 : f32
    %175 = vector.broadcast %cst_53 : f32 to vector<2x32xf32>
    %176 = arith.addf %175, %174 : vector<2x32xf32>
    %177 = arith.divf %175, %176 : vector<2x32xf32>
    %178 = vector.extract_strided_slice %171 {offsets = [0, 32], sizes = [2, 32], strides = [1, 1]} : vector<2x128xf32> to vector<2x32xf32>
    %179 = arith.negf %178 : vector<2x32xf32>
    %180 = math.exp %179 : vector<2x32xf32>
    %cst_54 = arith.constant 1.000000e+00 : f32
    %181 = vector.broadcast %cst_54 : f32 to vector<2x32xf32>
    %182 = arith.addf %181, %180 : vector<2x32xf32>
    %183 = arith.divf %181, %182 : vector<2x32xf32>
    %184 = vector.extract_strided_slice %171 {offsets = [0, 64], sizes = [2, 32], strides = [1, 1]} : vector<2x128xf32> to vector<2x32xf32>
    %185 = math.tanh %184 : vector<2x32xf32>
    %186 = vector.extract_strided_slice %171 {offsets = [0, 96], sizes = [2, 32], strides = [1, 1]} : vector<2x128xf32> to vector<2x32xf32>
    %187 = arith.negf %186 : vector<2x32xf32>
    %188 = math.exp %187 : vector<2x32xf32>
    %cst_55 = arith.constant 1.000000e+00 : f32
    %189 = vector.broadcast %cst_55 : f32 to vector<2x32xf32>
    %190 = arith.addf %189, %188 : vector<2x32xf32>
    %191 = arith.divf %189, %190 : vector<2x32xf32>
    %192 = arith.mulf %183, %155 : vector<2x32xf32>
    %193 = arith.mulf %177, %185 : vector<2x32xf32>
    %194 = arith.addf %192, %193 : vector<2x32xf32>
    %195 = math.tanh %194 : vector<2x32xf32>
    %196 = arith.mulf %191, %195 : vector<2x32xf32>
    %197 = vector.shape_cast %196 : vector<2x32xf32> to vector<1x2x32xf32>
    %c0_56 = arith.constant 0 : index
    %198 = arith.index_cast %164 : i32 to index
    %c0_57 = arith.constant 0 : index
    %c0_58 = arith.constant 0 : index
    %199 = vector.load %arg4[%c0_56, %198, %c0_57, %c0_58] : memref<1x8x2x32xf32, #tpu.memory_space<vmem>>, vector<1x1x2x32xf32>
    %200 = vector.shape_cast %199 : vector<1x1x2x32xf32> to vector<1x2x32xf32>
    %201 = vector.shape_cast %197 : vector<1x2x32xf32> to vector<1x1x2x32xf32>
    tpu.vector_store %arg4[%c0_56, %198, %c0_57, %c0_58], %201 {strides = array<i32>} : memref<1x8x2x32xf32, #tpu.memory_space<vmem>>, vector<1x1x2x32xf32>,
    %c-3_i32 = arith.constant -3 : i32
    %202 = arith.muli %arg0, %c-3_i32 : i32
    %c5_i32_59 = arith.constant 5 : i32
    %203 = arith.addi %c5_i32_59, %202 : i32
    %c0_60 = arith.constant 0 : index
    %204 = arith.index_cast %203 : i32 to index
    %c0_61 = arith.constant 0 : index
    %c0_62 = arith.constant 0 : index
    %205 = vector.load %arg2[%c0_60, %204, %c0_61, %c0_62] : memref<1x8x2x128xf32, #tpu.memory_space<vmem>>, vector<1x1x2x128xf32>
    %206 = vector.shape_cast %205 : vector<1x1x2x128xf32> to vector<1x2x128xf32>
    %207 = vector.shape_cast %206 : vector<1x2x128xf32> to vector<2x128xf32>
    %208 = arith.truncf %196 : vector<2x32xf32> to vector<2x32xbf16>
    %cst_63 = arith.constant dense<0.000000e+00> : vector<2x128xf32>
    %209 = tpu.matmul %208, %4, %cst_63 {dimension_numbers = #tpu.dot_dimension_numbers<[1], [0], [0], [1], [0, 0, 1, 1], [], []>} : vector<2x32xbf16>, vector<32x128xbf16>, vector<2x128xf32> -> vector<2x128xf32>
    %210 = arith.addf %207, %209 : vector<2x128xf32>
    %211 = vector.extract_strided_slice %210 {offsets = [0, 0], sizes = [2, 32], strides = [1, 1]} : vector<2x128xf32> to vector<2x32xf32>
    %212 = arith.negf %211 : vector<2x32xf32>
    %213 = math.exp %212 : vector<2x32xf32>
    %cst_64 = arith.constant 1.000000e+00 : f32
    %214 = vector.broadcast %cst_64 : f32 to vector<2x32xf32>
    %215 = arith.addf %214, %213 : vector<2x32xf32>
    %216 = arith.divf %214, %215 : vector<2x32xf32>
    %217 = vector.extract_strided_slice %210 {offsets = [0, 32], sizes = [2, 32], strides = [1, 1]} : vector<2x128xf32> to vector<2x32xf32>
    %218 = arith.negf %217 : vector<2x32xf32>
    %219 = math.exp %218 : vector<2x32xf32>
    %cst_65 = arith.constant 1.000000e+00 : f32
    %220 = vector.broadcast %cst_65 : f32 to vector<2x32xf32>
    %221 = arith.addf %220, %219 : vector<2x32xf32>
    %222 = arith.divf %220, %221 : vector<2x32xf32>
    %223 = vector.extract_strided_slice %210 {offsets = [0, 64], sizes = [2, 32], strides = [1, 1]} : vector<2x128xf32> to vector<2x32xf32>
    %224 = math.tanh %223 : vector<2x32xf32>
    %225 = vector.extract_strided_slice %210 {offsets = [0, 96], sizes = [2, 32], strides = [1, 1]} : vector<2x128xf32> to vector<2x32xf32>
    %226 = arith.negf %225 : vector<2x32xf32>
    %227 = math.exp %226 : vector<2x32xf32>
    %cst_66 = arith.constant 1.000000e+00 : f32
    %228 = vector.broadcast %cst_66 : f32 to vector<2x32xf32>
    %229 = arith.addf %228, %227 : vector<2x32xf32>
    %230 = arith.divf %228, %229 : vector<2x32xf32>
    %231 = arith.mulf %222, %194 : vector<2x32xf32>
    %232 = arith.mulf %216, %224 : vector<2x32xf32>
    %233 = arith.addf %231, %232 : vector<2x32xf32>
    %234 = math.tanh %233 : vector<2x32xf32>
    %235 = arith.mulf %230, %234 : vector<2x32xf32>
    %236 = vector.shape_cast %235 : vector<2x32xf32> to vector<1x2x32xf32>
    %c0_67 = arith.constant 0 : index
    %237 = arith.index_cast %203 : i32 to index
    %c0_68 = arith.constant 0 : index
    %c0_69 = arith.constant 0 : index
    %238 = vector.load %arg4[%c0_67, %237, %c0_68, %c0_69] : memref<1x8x2x32xf32, #tpu.memory_space<vmem>>, vector<1x1x2x32xf32>
    %239 = vector.shape_cast %238 : vector<1x1x2x32xf32> to vector<1x2x32xf32>
    %240 = vector.shape_cast %236 : vector<1x2x32xf32> to vector<1x1x2x32xf32>
    tpu.vector_store %arg4[%c0_67, %237, %c0_68, %c0_69], %240 {strides = array<i32>} : memref<1x8x2x32xf32, #tpu.memory_space<vmem>>, vector<1x1x2x32xf32>,
    %c-5_i32 = arith.constant -5 : i32
    %241 = arith.muli %arg0, %c-5_i32 : i32
    %c6_i32 = arith.constant 6 : i32
    %242 = arith.addi %c6_i32, %241 : i32
    %c0_70 = arith.constant 0 : index
    %243 = arith.index_cast %242 : i32 to index
    %c0_71 = arith.constant 0 : index
    %c0_72 = arith.constant 0 : index
    %244 = vector.load %arg2[%c0_70, %243, %c0_71, %c0_72] : memref<1x8x2x128xf32, #tpu.memory_space<vmem>>, vector<1x1x2x128xf32>
    %245 = vector.shape_cast %244 : vector<1x1x2x128xf32> to vector<1x2x128xf32>
    %246 = vector.shape_cast %245 : vector<1x2x128xf32> to vector<2x128xf32>
    %247 = arith.truncf %235 : vector<2x32xf32> to vector<2x32xbf16>
    %cst_73 = arith.constant dense<0.000000e+00> : vector<2x128xf32>
    %248 = tpu.matmul %247, %4, %cst_73 {dimension_numbers = #tpu.dot_dimension_numbers<[1], [0], [0], [1], [0, 0, 1, 1], [], []>} : vector<2x32xbf16>, vector<32x128xbf16>, vector<2x128xf32> -> vector<2x128xf32>
    %249 = arith.addf %246, %248 : vector<2x128xf32>
    %250 = vector.extract_strided_slice %249 {offsets = [0, 0], sizes = [2, 32], strides = [1, 1]} : vector<2x128xf32> to vector<2x32xf32>
    %251 = arith.negf %250 : vector<2x32xf32>
    %252 = math.exp %251 : vector<2x32xf32>
    %cst_74 = arith.constant 1.000000e+00 : f32
    %253 = vector.broadcast %cst_74 : f32 to vector<2x32xf32>
    %254 = arith.addf %253, %252 : vector<2x32xf32>
    %255 = arith.divf %253, %254 : vector<2x32xf32>
    %256 = vector.extract_strided_slice %249 {offsets = [0, 32], sizes = [2, 32], strides = [1, 1]} : vector<2x128xf32> to vector<2x32xf32>
    %257 = arith.negf %256 : vector<2x32xf32>
    %258 = math.exp %257 : vector<2x32xf32>
    %cst_75 = arith.constant 1.000000e+00 : f32
    %259 = vector.broadcast %cst_75 : f32 to vector<2x32xf32>
    %260 = arith.addf %259, %258 : vector<2x32xf32>
    %261 = arith.divf %259, %260 : vector<2x32xf32>
    %262 = vector.extract_strided_slice %249 {offsets = [0, 64], sizes = [2, 32], strides = [1, 1]} : vector<2x128xf32> to vector<2x32xf32>
    %263 = math.tanh %262 : vector<2x32xf32>
    %264 = vector.extract_strided_slice %249 {offsets = [0, 96], sizes = [2, 32], strides = [1, 1]} : vector<2x128xf32> to vector<2x32xf32>
    %265 = arith.negf %264 : vector<2x32xf32>
    %266 = math.exp %265 : vector<2x32xf32>
    %cst_76 = arith.constant 1.000000e+00 : f32
    %267 = vector.broadcast %cst_76 : f32 to vector<2x32xf32>
    %268 = arith.addf %267, %266 : vector<2x32xf32>
    %269 = arith.divf %267, %268 : vector<2x32xf32>
    %270 = arith.mulf %261, %233 : vector<2x32xf32>
    %271 = arith.mulf %255, %263 : vector<2x32xf32>
    %272 = arith.addf %270, %271 : vector<2x32xf32>
    %273 = math.tanh %272 : vector<2x32xf32>
    %274 = arith.mulf %269, %273 : vector<2x32xf32>
    %275 = vector.shape_cast %274 : vector<2x32xf32> to vector<1x2x32xf32>
    %c0_77 = arith.constant 0 : index
    %276 = arith.index_cast %242 : i32 to index
    %c0_78 = arith.constant 0 : index
    %c0_79 = arith.constant 0 : index
    %277 = vector.load %arg4[%c0_77, %276, %c0_78, %c0_79] : memref<1x8x2x32xf32, #tpu.memory_space<vmem>>, vector<1x1x2x32xf32>
    %278 = vector.shape_cast %277 : vector<1x1x2x32xf32> to vector<1x2x32xf32>
    %279 = vector.shape_cast %275 : vector<1x2x32xf32> to vector<1x1x2x32xf32>
    tpu.vector_store %arg4[%c0_77, %276, %c0_78, %c0_79], %279 {strides = array<i32>} : memref<1x8x2x32xf32, #tpu.memory_space<vmem>>, vector<1x1x2x32xf32>,
    %c-7_i32 = arith.constant -7 : i32
    %280 = arith.muli %arg0, %c-7_i32 : i32
    %c7_i32_80 = arith.constant 7 : i32
    %281 = arith.addi %c7_i32_80, %280 : i32
    %c0_81 = arith.constant 0 : index
    %282 = arith.index_cast %281 : i32 to index
    %c0_82 = arith.constant 0 : index
    %c0_83 = arith.constant 0 : index
    %283 = vector.load %arg2[%c0_81, %282, %c0_82, %c0_83] : memref<1x8x2x128xf32, #tpu.memory_space<vmem>>, vector<1x1x2x128xf32>
    %284 = vector.shape_cast %283 : vector<1x1x2x128xf32> to vector<1x2x128xf32>
    %285 = vector.shape_cast %284 : vector<1x2x128xf32> to vector<2x128xf32>
    %286 = arith.truncf %274 : vector<2x32xf32> to vector<2x32xbf16>
    %cst_84 = arith.constant dense<0.000000e+00> : vector<2x128xf32>
    %287 = tpu.matmul %286, %4, %cst_84 {dimension_numbers = #tpu.dot_dimension_numbers<[1], [0], [0], [1], [0, 0, 1, 1], [], []>} : vector<2x32xbf16>, vector<32x128xbf16>, vector<2x128xf32> -> vector<2x128xf32>
    %288 = arith.addf %285, %287 : vector<2x128xf32>
    %289 = vector.extract_strided_slice %288 {offsets = [0, 0], sizes = [2, 32], strides = [1, 1]} : vector<2x128xf32> to vector<2x32xf32>
    %290 = arith.negf %289 : vector<2x32xf32>
    %291 = math.exp %290 : vector<2x32xf32>
    %cst_85 = arith.constant 1.000000e+00 : f32
    %292 = vector.broadcast %cst_85 : f32 to vector<2x32xf32>
    %293 = arith.addf %292, %291 : vector<2x32xf32>
    %294 = arith.divf %292, %293 : vector<2x32xf32>
    %295 = vector.extract_strided_slice %288 {offsets = [0, 32], sizes = [2, 32], strides = [1, 1]} : vector<2x128xf32> to vector<2x32xf32>
    %296 = arith.negf %295 : vector<2x32xf32>
    %297 = math.exp %296 : vector<2x32xf32>
    %cst_86 = arith.constant 1.000000e+00 : f32
    %298 = vector.broadcast %cst_86 : f32 to vector<2x32xf32>
    %299 = arith.addf %298, %297 : vector<2x32xf32>
    %300 = arith.divf %298, %299 : vector<2x32xf32>
    %301 = vector.extract_strided_slice %288 {offsets = [0, 64], sizes = [2, 32], strides = [1, 1]} : vector<2x128xf32> to vector<2x32xf32>
    %302 = math.tanh %301 : vector<2x32xf32>
    %303 = vector.extract_strided_slice %288 {offsets = [0, 96], sizes = [2, 32], strides = [1, 1]} : vector<2x128xf32> to vector<2x32xf32>
    %304 = arith.negf %303 : vector<2x32xf32>
    %305 = math.exp %304 : vector<2x32xf32>
    %cst_87 = arith.constant 1.000000e+00 : f32
    %306 = vector.broadcast %cst_87 : f32 to vector<2x32xf32>
    %307 = arith.addf %306, %305 : vector<2x32xf32>
    %308 = arith.divf %306, %307 : vector<2x32xf32>
    %309 = arith.mulf %300, %272 : vector<2x32xf32>
    %310 = arith.mulf %294, %302 : vector<2x32xf32>
    %311 = arith.addf %309, %310 : vector<2x32xf32>
    %312 = math.tanh %311 : vector<2x32xf32>
    %313 = arith.mulf %308, %312 : vector<2x32xf32>
    %314 = vector.shape_cast %313 : vector<2x32xf32> to vector<1x2x32xf32>
    %c0_88 = arith.constant 0 : index
    %315 = arith.index_cast %281 : i32 to index
    %c0_89 = arith.constant 0 : index
    %c0_90 = arith.constant 0 : index
    %316 = vector.load %arg4[%c0_88, %315, %c0_89, %c0_90] : memref<1x8x2x32xf32, #tpu.memory_space<vmem>>, vector<1x1x2x32xf32>
    %317 = vector.shape_cast %316 : vector<1x1x2x32xf32> to vector<1x2x32xf32>
    %318 = vector.shape_cast %314 : vector<1x2x32xf32> to vector<1x1x2x32xf32>
    tpu.vector_store %arg4[%c0_88, %315, %c0_89, %c0_90], %318 {strides = array<i32>} : memref<1x8x2x32xf32, #tpu.memory_space<vmem>>, vector<1x1x2x32xf32>,
    %c0_91 = arith.constant 0 : index
    %c0_92 = arith.constant 0 : index
    %319 = vector.load %arg7[%c0_91, %c0_92] : memref<2x32xf32, #tpu.memory_space<vmem>>, vector<2x32xf32>
    tpu.vector_store %arg7[%c0_91, %c0_92], %313 {strides = array<i32>} : memref<2x32xf32, #tpu.memory_space<vmem>>, vector<2x32xf32>,
    %c0_93 = arith.constant 0 : index
    %c0_94 = arith.constant 0 : index
    %320 = vector.load %arg8[%c0_93, %c0_94] : memref<2x32xf32, #tpu.memory_space<vmem>>, vector<2x32xf32>
    tpu.vector_store %arg8[%c0_93, %c0_94], %311 {strides = array<i32>} : memref<2x32xf32, #tpu.memory_space<vmem>>, vector<2x32xf32>,
    %c0_i32_95 = arith.constant 0 : i32
    %321 = arith.cmpi eq, %arg1, %c0_i32_95 : i32
    %322 = arith.extui %321 : i1 to i32
    %c0_i32_96 = arith.constant 0 : i32
    %323 = arith.cmpi ne, %322, %c0_i32_96 : i32
    scf.if %323 {
      %c0_97 = arith.constant 0 : index
      %c0_98 = arith.constant 0 : index
      %c0_99 = arith.constant 0 : index
      %324 = vector.load %arg5[%c0_97, %c0_98, %c0_99] : memref<1x2x32xf32, #tpu.memory_space<vmem>>, vector<1x2x32xf32>
      %325 = vector.shape_cast %324 : vector<1x2x32xf32> to vector<2x32xf32>
      %326 = vector.shape_cast %313 : vector<2x32xf32> to vector<1x2x32xf32>
      tpu.vector_store %arg5[%c0_97, %c0_98, %c0_99], %326 {strides = array<i32>} : memref<1x2x32xf32, #tpu.memory_space<vmem>>, vector<1x2x32xf32>,
      %c0_100 = arith.constant 0 : index
      %c0_101 = arith.constant 0 : index
      %c0_102 = arith.constant 0 : index
      %327 = vector.load %arg6[%c0_100, %c0_101, %c0_102] : memref<1x2x32xf32, #tpu.memory_space<vmem>>, vector<1x2x32xf32>
      %328 = vector.shape_cast %327 : vector<1x2x32xf32> to vector<2x32xf32>
      %329 = vector.shape_cast %311 : vector<2x32xf32> to vector<1x2x32xf32>
      tpu.vector_store %arg6[%c0_100, %c0_101, %c0_102], %329 {strides = array<i32>} : memref<1x2x32xf32, #tpu.memory_space<vmem>>, vector<1x2x32xf32>,
    } else {
    }
    return
  }
  func.func @transform_0(%arg0: i32, %arg1: i32) -> (i32, i32, i32, i32) {
    %c2_i32 = arith.constant 2 : i32
    %0 = arith.muli %c2_i32, %arg1 : i32
    %c0_i32 = arith.constant 0 : i32
    %1 = arith.subi %c0_i32, %0 : i32
    %2 = arith.muli %arg0, %1 : i32
    %3 = arith.addi %arg1, %2 : i32
    %c0_i32_0 = arith.constant 0 : i32
    %c0_i32_1 = arith.constant 0 : i32
    %c0_i32_2 = arith.constant 0 : i32
    return %arg0, %3, %c0_i32_0, %c0_i32_1 : i32, i32, i32, i32
  }
  func.func @transform_1(%arg0: i32, %arg1: i32) -> (i32, i32, i32) {
    %c0_i32 = arith.constant 0 : i32
    %c0_i32_0 = arith.constant 0 : i32
    %c0_i32_1 = arith.constant 0 : i32
    return %arg0, %c0_i32, %c0_i32_0 : i32, i32, i32
  }
  func.func @transform_2(%arg0: i32, %arg1: i32) -> (i32, i32, i32, i32) {
    %c2_i32 = arith.constant 2 : i32
    %0 = arith.muli %c2_i32, %arg1 : i32
    %c0_i32 = arith.constant 0 : i32
    %1 = arith.subi %c0_i32, %0 : i32
    %2 = arith.muli %arg0, %1 : i32
    %3 = arith.addi %arg1, %2 : i32
    %c0_i32_0 = arith.constant 0 : i32
    %c0_i32_1 = arith.constant 0 : i32
    %c0_i32_2 = arith.constant 0 : i32
    return %arg0, %3, %c0_i32_0, %c0_i32_1 : i32, i32, i32, i32
  }
  func.func @transform_3(%arg0: i32, %arg1: i32) -> (i32, i32, i32) {
    %c0_i32 = arith.constant 0 : i32
    %c0_i32_0 = arith.constant 0 : i32
    %c0_i32_1 = arith.constant 0 : i32
    return %arg0, %c0_i32, %c0_i32_0 : i32, i32, i32
  }
  func.func @transform_4(%arg0: i32, %arg1: i32) -> (i32, i32, i32) {
    %c0_i32 = arith.constant 0 : i32
    %c0_i32_0 = arith.constant 0 : i32
    %c0_i32_1 = arith.constant 0 : i32
    return %arg0, %c0_i32, %c0_i32_0 : i32, i32, i32
  }
}

</mosaic_0001>

<llo_original>
// kernel: tpu_custom_call.1
$region0: #{tpu_custom_call.1}
  #allocation0 [shape = 'u32[]', space=smem, size = 0x4, offset = 0x4, fixed_abs, tag = 'smem constant byte address 0x4 - core index']
  #allocation1 [shape = 'u32[72,128]{1,0:T(1,128)}', space=vmem, size = 0x9000, scoped, tag = 'internal scratch']
  #allocation2 [shape = 'f32[2,32]{1,0:T(2,128)}', space=vmem, size = 0x400, scoped, tag = 'scratch operand']
  #allocation3 [shape = 'f32[2,32]{1,0:T(2,128)}', space=vmem, size = 0x400, scoped, tag = 'scratch operand']
  %s0 = inlined_call_operand.hbm [shape: f32[2,8,2,128], index: 0, kind: input, shape index: {}]
  %s1 = inlined_call_operand.hbm [shape: bf16[2,32,128], index: 1, kind: input, shape index: {}]
  %s2 = inlined_call_operand.hbm [shape: f32[2,8,2,32], index: 2, kind: output, shape index: {0}]
  %s3 = inlined_call_operand.hbm [shape: f32[2,2,32], index: 3, kind: output, shape index: {1}]
  %s4 = inlined_call_operand.hbm [shape: f32[2,2,32], index: 4, kind: output, shape index: {2}]
  %5 = xla_tuple %s2, %s3, %s4
  %s6 = sld [smem:[#allocation0]]
  $region73: #{tpu_custom_call.1} parent=0
    _
  %s8 = ssub.s32 1, %s6
  %s9 = scalar_select 0, %s8, %s6
  $region1: #{tpu_custom_call.1} parent=0
    #allocation4 [shape = 'u8[16384]{0}', space=vmem, size = 0x4000, scoped, tag = 'input window, operand 0']
    #allocation5 [shape = 's32[2]{0}', space=sflag, size = 0x8, scoped, tag = 'scoped memory for tpu_custom_call.1']
    #allocation6 [shape = 's32[2]{0}', space=sflag, size = 0x8, scoped, tag = 'scoped memory for tpu_custom_call.1']
    #allocation7 [shape = 'u8[16384]{0}', space=vmem, size = 0x4000, scoped, tag = 'input window, operand 1']
    #allocation8 [shape = 's32[2]{0}', space=sflag, size = 0x8, scoped, tag = 'scoped memory for tpu_custom_call.1']
    #allocation9 [shape = 'u8[16384]{0}', space=vmem, size = 0x4000, scoped, tag = 'output window, operand 0']
    #allocation10 [shape = 'u8[2048]{0}', space=vmem, size = 0x800, scoped, tag = 'output window, operand 1']
    #allocation11 [shape = 's32[2]{0}', space=sflag, size = 0x8, scoped, tag = 'scoped memory for tpu_custom_call.1']
    #allocation12 [shape = 'u8[2048]{0}', space=vmem, size = 0x800, scoped, tag = 'output window, operand 2']
    %10 = vsyncpa [#allocation5], 0
    %s11 = scalar_lea.sflag [#allocation5], 1
    %12 = vsyncpa %s11, 0
    %13 = vsyncpa [#allocation8], 0
    %s14 = scalar_lea.sflag [#allocation8], 1
    %15 = vsyncpa %s14, 0
    %16 = vsyncpa [#allocation6], 0
    %s17 = scalar_lea.sflag [#allocation6], 1
    %18 = vsyncpa %s17, 0
    %19 = vsyncpa [#allocation11], 0
    %s20 = scalar_lea.sflag [#allocation11], 1
    %21 = vsyncpa %s20, 0
    loop: start=0, step=1, limit=4
    $region2: #{tpu_custom_call.1} parent=1 // loop_pre_header
      _
    $region3: #{tpu_custom_call.1} parent=1 // loop_header
      %s23 = sphi 0, %s27
      %p24 = scmp.ge.s32.totalorder %s23, 4
      %s30 = sphi 0, %s42
      %s31 = sphi 0, %s38
      %s32 = sphi 0, %s30
      %s33 = sphi 0, %s31
      %s34 = sphi 0, %s32
      %s35 = sphi 0, %s33
      %s55 = sphi 0, %s57
      %s58 = sphi 0, %s55
      %s59 = sphi 0, %s58
      %s75 = sphi 0, %s59
      %s81 = sphi 0, %s83
      %s84 = sphi 0, %s81
      %s85 = sphi 0, %s84
      %s101 = sphi 0, %s85
      %s117 = sphi 0, %s119
      %s120 = sphi 0, %s117
      %s121 = sphi 0, %s120
      %s137 = sphi 0, %s121
      %s143 = sphi 0, %s145
      %s146 = sphi 0, %s143
      %s147 = sphi 0, %s146
      %s163 = sphi 0, %s147
      %s169 = sphi 0, %s171
      %s172 = sphi 0, %s169
      %s173 = sphi 0, %s172
      %s189 = sphi 0, %s173
    $region4: #{tpu_custom_call.1} parent=1 // loop_header_branch
      %26 = sbr.rel (%p24) target = $region8
    $region5: #{tpu_custom_call.1} parent=1 // loop_body
      %s28 = ssub.s32 %s23, 1
      %s29 = ssub.s32 %s23, 2
      %s36 = sadd.s32 1, %s31
      %p37 = scmp.ge.s32.totalorder %s36, 1
      %s38 = scalar_select %p37, 0, %s36
      %s39 = sadd.s32 1, %s30
      %s40 = scalar_select %p37, %s39, %s30
      %p41 = scmp.ge.s32.totalorder %s40, 2
      %s42 = scalar_select %p41, 0, %s40
      %s43 = smul.u32 %s31, 2
      %s44 = ssub.s32 0, %s43
      %s45 = smul.u32 %s30, %s44
      %s46 = sadd.s32 %s31, %s45
      %s47 = smul.u32 %s38, 2
      %s48 = ssub.s32 0, %s47
      %s49 = smul.u32 %s42, %s48
      %s50 = sadd.s32 %s38, %s49
      %s51 = ssub.s32 %s30, %s42
      %s52 = ssub.s32 %s46, %s50
      %s53 = sor.u32 %s51, %s52
      %p54 = scmp.eq.s32.totalorder %s53, 0
      %s56 = sadd.s32 %s55, 1
      %s57 = scalar_select %p54, %s55, %s56
      %p60 = pneg %p54
      %p61 = scmp.eq.s32.totalorder %s23, 1
      %p62 = por %p60, %p61
      %p63 = scmp.ne.s32.totalorder %s55, %s58
      %p64 = scmp.eq.s32.totalorder %s23, 0
      %p65 = por %p63, %p64
      %p66 = scmp.ne.s32.totalorder %s55, %s58
      %p67 = scmp.eq.s32.totalorder %s28, 1
      %p68 = por %p66, %p67
      %p69 = scmp.ne.s32.totalorder %s58, %s59
      %p70 = scmp.eq.s32.totalorder %s28, 0
      %p71 = por %p69, %p70
      %p72 = scmp.ne.s32.totalorder %s58, %s59
      %p73 = scmp.eq.s32.totalorder %s29, 1
      %p74 = por %p72, %p73
      %p76 = scmp.ne.s32.totalorder %s59, %s75
      %p77 = scmp.eq.s32.totalorder %s29, 0
      %p78 = por %p76, %p77
      %s79 = ssub.s32 %s30, %s42
      %p80 = scmp.eq.s32.totalorder %s79, 0
      %s82 = sadd.s32 %s81, 1
      %s83 = scalar_select %p80, %s81, %s82
      %p86 = pneg %p80
      %p87 = scmp.eq.s32.totalorder %s23, 1
      %p88 = por %p86, %p87
      %p89 = scmp.ne.s32.totalorder %s81, %s84
      %p90 = scmp.eq.s32.totalorder %s23, 0
      %p91 = por %p89, %p90
      %p92 = scmp.ne.s32.totalorder %s81, %s84
      %p93 = scmp.eq.s32.totalorder %s28, 1
      %p94 = por %p92, %p93
      %p95 = scmp.ne.s32.totalorder %s84, %s85
      %p96 = scmp.eq.s32.totalorder %s28, 0
      %p97 = por %p95, %p96
      %p98 = scmp.ne.s32.totalorder %s84, %s85
      %p99 = scmp.eq.s32.totalorder %s29, 1
      %p100 = por %p98, %p99
      %p102 = scmp.ne.s32.totalorder %s85, %s101
      %p103 = scmp.eq.s32.totalorder %s29, 0
      %p104 = por %p102, %p103
      %s105 = smul.u32 %s31, 2
      %s106 = ssub.s32 0, %s105
      %s107 = smul.u32 %s30, %s106
      %s108 = sadd.s32 %s31, %s107
      %s109 = smul.u32 %s38, 2
      %s110 = ssub.s32 0, %s109
      %s111 = smul.u32 %s42, %s110
      %s112 = sadd.s32 %s38, %s111
      %s113 = ssub.s32 %s30, %s42
      %s114 = ssub.s32 %s108, %s112
      %s115 = sor.u32 %s113, %s114
      %p116 = scmp.eq.s32.totalorder %s115, 0
      %s118 = sadd.s32 %s117, 1
      %s119 = scalar_select %p116, %s117, %s118
      %p122 = pneg %p116
      %p123 = scmp.eq.s32.totalorder %s23, 1
      %p124 = por %p122, %p123
      %p125 = scmp.ne.s32.totalorder %s117, %s120
      %p126 = scmp.eq.s32.totalorder %s23, 0
      %p127 = por %p125, %p126
      %p128 = scmp.ne.s32.totalorder %s117, %s120
      %p129 = scmp.eq.s32.totalorder %s28, 1
      %p130 = por %p128, %p129
      %p131 = scmp.ne.s32.totalorder %s120, %s121
      %p132 = scmp.eq.s32.totalorder %s28, 0
      %p133 = por %p131, %p132
      %p134 = scmp.ne.s32.totalorder %s120, %s121
      %p135 = scmp.eq.s32.totalorder %s29, 1
      %p136 = por %p134, %p135
      %p138 = scmp.ne.s32.totalorder %s121, %s137
      %p139 = scmp.eq.s32.totalorder %s29, 0
      %p140 = por %p138, %p139
      %s141 = ssub.s32 %s30, %s42
      %p142 = scmp.eq.s32.totalorder %s141, 0
      %s144 = sadd.s32 %s143, 1
      %s145 = scalar_select %p142, %s143, %s144
      %p148 = pneg %p142
      %p149 = scmp.eq.s32.totalorder %s23, 1
      %p150 = por %p148, %p149
      %p151 = scmp.ne.s32.totalorder %s143, %s146
      %p152 = scmp.eq.s32.totalorder %s23, 0
      %p153 = por %p151, %p152
      %p154 = scmp.ne.s32.totalorder %s143, %s146
      %p155 = scmp.eq.s32.totalorder %s28, 1
      %p156 = por %p154, %p155
      %p157 = scmp.ne.s32.totalorder %s146, %s147
      %p158 = scmp.eq.s32.totalorder %s28, 0
      %p159 = por %p157, %p158
      %p160 = scmp.ne.s32.totalorder %s146, %s147
      %p161 = scmp.eq.s32.totalorder %s29, 1
      %p162 = por %p160, %p161
      %p164 = scmp.ne.s32.totalorder %s147, %s163
      %p165 = scmp.eq.s32.totalorder %s29, 0
      %p166 = por %p164, %p165
      %s167 = ssub.s32 %s30, %s42
      %p168 = scmp.eq.s32.totalorder %s167, 0
      %s170 = sadd.s32 %s169, 1
      %s171 = scalar_select %p168, %s169, %s170
      %p174 = pneg %p168
      %p175 = scmp.eq.s32.totalorder %s23, 1
      %p176 = por %p174, %p175
      %p177 = scmp.ne.s32.totalorder %s169, %s172
      %p178 = scmp.eq.s32.totalorder %s23, 0
      %p179 = por %p177, %p178
      %p180 = scmp.ne.s32.totalorder %s169, %s172
      %p181 = scmp.eq.s32.totalorder %s28, 1
      %p182 = por %p180, %p181
      %p183 = scmp.ne.s32.totalorder %s172, %s173
      %p184 = scmp.eq.s32.totalorder %s28, 0
      %p185 = por %p183, %p184
      %p186 = scmp.ne.s32.totalorder %s172, %s173
      %p187 = scmp.eq.s32.totalorder %s29, 1
      %p188 = por %p186, %p187
      %p190 = scmp.ne.s32.totalorder %s173, %s189
      %p191 = scmp.eq.s32.totalorder %s29, 0
      %p192 = por %p190, %p191
      %p193 = scmp.le.s32.totalorder 1, %s23
      %p194 = scmp.lt.s32.totalorder %s23, 3
      %p195 = pnand %p193, %p194
      %p196 = pneg %p195
      // Predicated region
      $region9: #{tpu_custom_call.1} parent=5 // pred_check
        _
      $region10: #{tpu_custom_call.1} parent=5 // pred_check_branch
        %198 = sbr.rel (%p195) target = $region12
      $region11: #{tpu_custom_call.1} parent=5 // pred_region
        %s199 = ssub.s32 %s23, 1
      $region12: #{tpu_custom_call.1} parent=5 // pred_fallthru
        _
      %p200 = scmp.lt.s32.totalorder %s23, 2
      // Predicated region
      $region13: #{tpu_custom_call.1} parent=5 // pred_check
        %p201 = pneg %p200
      $region14: #{tpu_custom_call.1} parent=5 // pred_check_branch
        %203 = sbr.rel (%p201) target = $region16
      $region15: #{tpu_custom_call.1} parent=5 // pred_region
        // Predicated region
        $region17: #{tpu_custom_call.1} parent=15 // pred_check
          %p204 = pneg %p65
        $region18: #{tpu_custom_call.1} parent=15 // pred_check_branch
          %206 = sbr.rel (%p204) target = $region20
        $region19: #{tpu_custom_call.1} parent=15 // pred_region
          %s207 = sand.u32 %s55, 1
          %s208 = scalar_lea.sflag [#allocation5], %s207
          %s209 = sand.u32 %s55, 1
          %s210 = smul.addr %s209, 16
          %s211 = scalar_lea.vmem [#allocation4], %s210
          %s212 = smul.u32 %s31, 2
          %s213 = ssub.s32 0, %s212
          %s214 = smul.u32 %s30, %s213
          %s215 = sadd.s32 %s31, %s214
          %s216 = smul.u32 8, %s215
          %218 = vsyncadd %s208, 0
          %s219 = smul.addr %s30, 8
          %s220 = sadd.s32 %s216, %s219
          %s221 = smul.addr %s220, 2
          %s222 = scalar_lea.hbm %s0, %s221
          %s223 = sshll.u32 %s222, 4
          %s224 = int_to_ptr.hbm [resolvable:$true] %s223
          %s225 = sshll.u32 %s211, 4
          %s226 = int_to_ptr.vmem [resolvable:$true] %s225
          %231 = dma.hbm_to_vmem [thread:$0]  %s224, 256, %s226, %s208, 32, 32, 2
        $region20: #{tpu_custom_call.1} parent=15 // pred_fallthru
          _
        // Predicated region
        $region21: #{tpu_custom_call.1} parent=15 // pred_check
          %p232 = pneg %p91
        $region22: #{tpu_custom_call.1} parent=15 // pred_check_branch
          %234 = sbr.rel (%p232) target = $region24
        $region23: #{tpu_custom_call.1} parent=15 // pred_region
          %s235 = sand.u32 %s81, 1
          %s236 = scalar_lea.sflag [#allocation8], %s235
          %s237 = sand.u32 %s81, 1
          %s238 = smul.addr %s237, 16
          %s239 = scalar_lea.vmem [#allocation7], %s238
          %241 = vsyncadd %s236, 0
          %s242 = smul.addr %s30, 4
          %s243 = smul.addr %s242, 4
          %s244 = scalar_lea.hbm %s1, %s243
          %s245 = sshll.u32 %s244, 4
          %s246 = int_to_ptr.hbm [resolvable:$true] %s245
          %s247 = sshll.u32 %s239, 4
          %s248 = int_to_ptr.vmem [resolvable:$true] %s247
          %253 = dma.hbm_to_vmem [thread:$0]  %s246, 256, %s248, %s236, 64, 64, 4
        $region24: #{tpu_custom_call.1} parent=15 // pred_fallthru
          _
      $region16: #{tpu_custom_call.1} parent=5 // pred_fallthru
        _
      %p254 = scmp.le.s32.totalorder 1, %s23
      %p255 = scmp.lt.s32.totalorder %s23, 3
      %p256 = pnand %p254, %p255
      %p257 = pneg %p256
      // Predicated region
      $region25: #{tpu_custom_call.1} parent=5 // pred_check
        _
      $region26: #{tpu_custom_call.1} parent=5 // pred_check_branch
        %259 = sbr.rel (%p256) target = $region28
      $region27: #{tpu_custom_call.1} parent=5 // pred_region
        %s260 = ssub.s32 %s23, 1
        %s261 = sand.u32 %s58, 1
        %s262 = scalar_lea.sflag [#allocation5], %s261
        %s263 = sand.u32 %s58, 1
        %s264 = smul.addr %s263, 16
        %s265 = scalar_lea.vmem [#allocation4], %s264
        // Predicated region
        $region29: #{tpu_custom_call.1} parent=27 // pred_check
          %p266 = pneg %p71
        $region30: #{tpu_custom_call.1} parent=27 // pred_check_branch
          %268 = sbr.rel (%p266) target = $region32
        $region31: #{tpu_custom_call.1} parent=27 // pred_region
          %270 = dma.done %s262, 256
        $region32: #{tpu_custom_call.1} parent=27 // pred_fallthru
          _
        %s271 = sand.u32 %s84, 1
        %s272 = scalar_lea.sflag [#allocation8], %s271
        %s273 = sand.u32 %s84, 1
        %s274 = smul.addr %s273, 16
        %s275 = scalar_lea.vmem [#allocation7], %s274
        // Predicated region
        $region33: #{tpu_custom_call.1} parent=27 // pred_check
          %p276 = pneg %p97
        $region34: #{tpu_custom_call.1} parent=27 // pred_check_branch
          %278 = sbr.rel (%p276) target = $region36
        $region35: #{tpu_custom_call.1} parent=27 // pred_region
          %280 = dma.done %s272, 256
        $region36: #{tpu_custom_call.1} parent=27 // pred_fallthru
          _
        %s281 = sand.u32 %s58, 1
        %s282 = scalar_lea.sflag [#allocation5], %s281
        %s283 = sand.u32 %s58, 1
        %s284 = smul.addr %s283, 16
        %s285 = scalar_lea.vmem [#allocation4], %s284
        %p286 = pneg %p71
        %p287 = pneg %p68
        %s288 = sand.u32 %s84, 1
        %s289 = scalar_lea.sflag [#allocation8], %s288
        %s290 = sand.u32 %s84, 1
        %s291 = smul.addr %s290, 16
        %s292 = scalar_lea.vmem [#allocation7], %s291
        %p293 = pneg %p97
        %p294 = pneg %p94
        %p295 = pneg %p133
        %p296 = pneg %p130
        %s297 = sand.u32 %s120, 1
        %s298 = scalar_lea.sflag [#allocation6], %s297
        %s299 = sand.u32 %s120, 1
        %s300 = smul.addr %s299, 16
        %s301 = scalar_lea.vmem [#allocation9], %s300
        %p302 = pneg %p159
        %p303 = pneg %p156
        %s304 = sand.u32 %s28, 1
        %s305 = scalar_lea.sflag [#allocation11], %s304
        %s306 = sand.u32 %s146, 1
        %s307 = smul.addr %s306, 2
        %s308 = scalar_lea.vmem [#allocation10], %s307
        %p309 = pneg %p185
        %p310 = pneg %p182
        %s311 = sand.u32 %s28, 1
        %s312 = scalar_lea.sflag [#allocation11], %s311
        %s313 = sand.u32 %s172, 1
        %s314 = smul.addr %s313, 2
        %s315 = scalar_lea.vmem [#allocation12], %s314
        %s316 = smul.u32 %s33, 2
        %s317 = ssub.s32 0, %s316
        %s318 = smul.u32 %s32, %s317
        %s319 = sadd.s32 %s33, %s318
        %s320 = smul.u32 8, %s319
        %s321 = smul.u32 %s33, 2
        %s322 = ssub.s32 0, %s321
        %s323 = smul.u32 %s32, %s322
        %s324 = sadd.s32 %s33, %s323
        %s325 = smul.u32 8, %s324
        %p327 = scmp.eq.s32.totalorder %s33, 0
        // Predicated region
        $region37: #{tpu_custom_call.1} parent=27 // pred_check
          %p328 = pneg %p327
        $region38: #{tpu_custom_call.1} parent=27 // pred_check_branch
          %330 = sbr.rel (%p328) target = $region40
        $region39: #{tpu_custom_call.1} parent=27 // pred_region
          %vm331 = vcmask 254976
          %332 = vst.msk [vmem:[#allocation2] sm:$0x3] %vm331, 0.0
          %333 = vst.msk [vmem:[#allocation3] sm:$0x3] %vm331, 0.0
        $region40: #{tpu_custom_call.1} parent=27 // pred_fallthru
          _
        %v334 = vld [vmem:[%s275] sm:$0xf]
        %v335 = vld [vmem:[%s275 + $0x4] sm:$0xf]
        %v336 = vld [vmem:[%s275 + $0x8] sm:$0xf]
        %v337 = vld [vmem:[%s275 + $0xc] sm:$0xf]
        %v338 = vld [vmem:[#allocation2] sm:$0x3]
        %v339 = vld [vmem:[#allocation3] sm:$0x3]
        %s340 = smul.u32 %s32, 7
        %s341 = smul.u32 %s340, 2
        %s342 = scalar_lea.vmem %s265, %s341 [#allocation4]
        %v343 = vld [vmem:[%s342] sm:$0x3]
        %v344 = vpack.c.bf16 %v338, %v338
        %v349 = vunpack.c.l.b16 %v334
        %v350 = vunpack.c.l.b16 %v335
        %v351 = vunpack.c.l.b16 %v336
        %v352 = vunpack.c.l.b16 %v337
        %v353 = vpack.c.b16 %v350, %v349
        %v354 = vpack.c.b16 %v352, %v351
        %vm357 = vcmask 261120
        %v359 = vsel %vm357, %v344, 0
        %361 = vmatpush.bf16.msra.mxu0 0
        %362 = vmatpush.bf16.msra.mxu0 0
        %363 = vmatpush.bf16.msra.mxu0 0
        %364 = vmatpush.bf16.msra.mxu0 0
        %365 = vmatpush.bf16.msra.mxu0 0
        %366 = vmatpush.bf16.msra.mxu0 0
        %367 = vmatpush.bf16.msra.mxu0 %v354
        %368 = vmatpush.bf16.msra.mxu0 %v353
        %369 = vmatmul.bf16.gmra.mxu0 %v359
        %v370 = vpop.f32.mrf.mxu0
        %v371 = vadd.f32 0.0, %v370
        %v372 = vpop.f32.mrf.mxu0
        %373 = vdwg.mxu0
        %v374 = vadd.f32 %v343, %v371
        %v375 = vxor.u32 %v374, 2147483648
        %v376 = vmul.f32 %v375, 1.442695
        %v377 = vpow.pop %v376
        %v378 = vadd.f32 %v377, 1.0
        %v379 = vrcp.pop %v378
        %v380 = vmul.f32 %v378, %v379
        %v381 = vsub.f32 1.0, %v380
        %v382 = vmul.f32 %v379, %v381
        %v383 = vadd.f32 %v379, %v382
        %vm384 = vweird.f32 %v378
        %vm385 = vweird.f32 %v379
        %vm386 = vmor %vm384, %vm385
        %v387 = vsel %vm386, %v379, %v383
        %v388 = vand.u32 2147483647, %v378
        %vm389 = vcmp.eq.f32.partialorder %v388, 8.507059e+37
        %v390 = vand.u32 %v378, 2147483648
        %v391 = vor.u32 1.1754944e-38, %v390
        %v392 = vsel %vm389, %v391, %v387
        %v393 = vmul.f32 1.0, %v392
        %v394 = vtanh.pop %v374
        %396 = vrot.lane.b32.xlu0 %v339, 32
        %v397 = vpop.permute.xlu0 %396
        %v399 = vmul.f32 %v393, %v397
        %401 = vrot.lane.b32.xlu0 %v394, 64
        %v402 = vpop.permute.xlu0 %401
        %v404 = vmul.f32 %v393, %v402
        %406 = vrot.lane.b32.xlu0 %v404, 32
        %v407 = vpop.permute.xlu0 %406
        %v409 = vadd.f32 %v399, %v407
        %v410 = vtanh.pop %v409
        %412 = vrot.lane.b32.xlu0 %v410, 64
        %v413 = vpop.permute.xlu0 %412
        %v415 = vmul.f32 %v393, %v413
        %417 = vrot.lane.b32.xlu0 %v415, 32
        %v418 = vpop.permute.xlu0 %417
        %s420 = scalar_lea.vmem %s301, %s341 [#allocation9]
        %vm421 = vcmask 254976
        %422 = vst.msk [vmem:[%s420] sm:$0x3] %vm421, %v418
        %s423 = smul.u32 %s32, 5
        %s424 = sadd.s32 %s423, 1
        %s425 = smul.u32 %s424, 2
        %s426 = scalar_lea.vmem %s265, %s425 [#allocation4]
        %v427 = vld [vmem:[%s426] sm:$0x3]
        %v428 = vpack.c.bf16 %v415, %v415
        %430 = vrot.lane.b32.xlu0 %v428, 32
        %v431 = vpop.permute.xlu0 %430
        %v433 = vsel %vm357, %v431, 0
        %435 = vmatpush.bf16.msra.mxu0 0
        %436 = vmatpush.bf16.msra.mxu0 0
        %437 = vmatpush.bf16.msra.mxu0 0
        %438 = vmatpush.bf16.msra.mxu0 0
        %439 = vmatpush.bf16.msra.mxu0 0
        %440 = vmatpush.bf16.msra.mxu0 0
        %441 = vmatpush.bf16.msra.mxu0 %v354
        %442 = vmatpush.bf16.msra.mxu0 %v353
        %443 = vmatmul.bf16.gmra.mxu0 %v433
        %v444 = vpop.f32.mrf.mxu0
        %v445 = vadd.f32 0.0, %v444
        %v446 = vpop.f32.mrf.mxu0
        %447 = vdwg.mxu0
        %v448 = vadd.f32 %v427, %v445
        %v449 = vxor.u32 %v448, 2147483648
        %v450 = vmul.f32 %v449, 1.442695
        %v451 = vpow.pop %v450
        %v452 = vadd.f32 %v451, 1.0
        %v453 = vrcp.pop %v452
        %v454 = vmul.f32 %v452, %v453
        %v455 = vsub.f32 1.0, %v454
        %v456 = vmul.f32 %v453, %v455
        %v457 = vadd.f32 %v453, %v456
        %vm458 = vweird.f32 %v452
        %vm459 = vweird.f32 %v453
        %vm460 = vmor %vm458, %vm459
        %v461 = vsel %vm460, %v453, %v457
        %v462 = vand.u32 2147483647, %v452
        %vm463 = vcmp.eq.f32.partialorder %v462, 8.507059e+37
        %v464 = vand.u32 %v452, 2147483648
        %v465 = vor.u32 1.1754944e-38, %v464
        %v466 = vsel %vm463, %v465, %v461
        %v467 = vmul.f32 1.0, %v466
        %v468 = vtanh.pop %v448
        %v469 = vmul.f32 %v467, %v409
        %471 = vrot.lane.b32.xlu0 %v468, 64
        %v472 = vpop.permute.xlu0 %471
        %v474 = vmul.f32 %v467, %v472
        %476 = vrot.lane.b32.xlu0 %v474, 32
        %v477 = vpop.permute.xlu0 %476
        %v479 = vadd.f32 %v469, %v477
        %v480 = vtanh.pop %v479
        %482 = vrot.lane.b32.xlu0 %v480, 64
        %v483 = vpop.permute.xlu0 %482
        %v485 = vmul.f32 %v467, %v483
        %487 = vrot.lane.b32.xlu0 %v485, 32
        %v488 = vpop.permute.xlu0 %487
        %s490 = scalar_lea.vmem %s301, %s425 [#allocation9]
        %491 = vst.msk [vmem:[%s490] sm:$0x3] %vm421, %v488
        %s492 = smul.u32 %s32, 3
        %s493 = sadd.s32 %s492, 2
        %s494 = smul.u32 %s493, 2
        %s495 = scalar_lea.vmem %s265, %s494 [#allocation4]
        %v496 = vld [vmem:[%s495] sm:$0x3]
        %v497 = vpack.c.bf16 %v485, %v485
        %499 = vrot.lane.b32.xlu0 %v497, 32
        %v500 = vpop.permute.xlu0 %499
        %v502 = vsel %vm357, %v500, 0
        %504 = vmatpush.bf16.msra.mxu0 0
        %505 = vmatpush.bf16.msra.mxu0 0
        %506 = vmatpush.bf16.msra.mxu0 0
        %507 = vmatpush.bf16.msra.mxu0 0
        %508 = vmatpush.bf16.msra.mxu0 0
        %509 = vmatpush.bf16.msra.mxu0 0
        %510 = vmatpush.bf16.msra.mxu0 %v354
        %511 = vmatpush.bf16.msra.mxu0 %v353
        %512 = vmatmul.bf16.gmra.mxu0 %v502
        %v513 = vpop.f32.mrf.mxu0
        %v514 = vadd.f32 0.0, %v513
        %v515 = vpop.f32.mrf.mxu0
        %516 = vdwg.mxu0
        %v517 = vadd.f32 %v496, %v514
        %v518 = vxor.u32 %v517, 2147483648
        %v519 = vmul.f32 %v518, 1.442695
        %v520 = vpow.pop %v519
        %v521 = vadd.f32 %v520, 1.0
        %v522 = vrcp.pop %v521
        %v523 = vmul.f32 %v521, %v522
        %v524 = vsub.f32 1.0, %v523
        %v525 = vmul.f32 %v522, %v524
        %v526 = vadd.f32 %v522, %v525
        %vm527 = vweird.f32 %v521
        %vm528 = vweird.f32 %v522
        %vm529 = vmor %vm527, %vm528
        %v530 = vsel %vm529, %v522, %v526
        %v531 = vand.u32 2147483647, %v521
        %vm532 = vcmp.eq.f32.partialorder %v531, 8.507059e+37
        %v533 = vand.u32 %v521, 2147483648
        %v534 = vor.u32 1.1754944e-38, %v533
        %v535 = vsel %vm532, %v534, %v530
        %v536 = vmul.f32 1.0, %v535
        %v537 = vtanh.pop %v517
        %v538 = vmul.f32 %v536, %v479
        %540 = vrot.lane.b32.xlu0 %v537, 64
        %v541 = vpop.permute.xlu0 %540
        %v543 = vmul.f32 %v536, %v541
        %545 = vrot.lane.b32.xlu0 %v543, 32
        %v546 = vpop.permute.xlu0 %545
        %v548 = vadd.f32 %v538, %v546
        %v549 = vtanh.pop %v548
        %551 = vrot.lane.b32.xlu0 %v549, 64
        %v552 = vpop.permute.xlu0 %551
        %v554 = vmul.f32 %v536, %v552
        %556 = vrot.lane.b32.xlu0 %v554, 32
        %v557 = vpop.permute.xlu0 %556
        %s559 = scalar_lea.vmem %s301, %s494 [#allocation9]
        %560 = vst.msk [vmem:[%s559] sm:$0x3] %vm421, %v557
        %s561 = sadd.s32 %s32, 3
        %s562 = smul.u32 %s561, 2
        %s563 = scalar_lea.vmem %s265, %s562 [#allocation4]
        %v564 = vld [vmem:[%s563] sm:$0x3]
        %v565 = vpack.c.bf16 %v554, %v554
        %567 = vrot.lane.b32.xlu0 %v565, 32
        %v568 = vpop.permute.xlu0 %567
        %v570 = vsel %vm357, %v568, 0
        %572 = vmatpush.bf16.msra.mxu0 0
        %573 = vmatpush.bf16.msra.mxu0 0
        %574 = vmatpush.bf16.msra.mxu0 0
        %575 = vmatpush.bf16.msra.mxu0 0
        %576 = vmatpush.bf16.msra.mxu0 0
        %577 = vmatpush.bf16.msra.mxu0 0
        %578 = vmatpush.bf16.msra.mxu0 %v354
        %579 = vmatpush.bf16.msra.mxu0 %v353
        %580 = vmatmul.bf16.gmra.mxu0 %v570
        %v581 = vpop.f32.mrf.mxu0
        %v582 = vadd.f32 0.0, %v581
        %v583 = vpop.f32.mrf.mxu0
        %584 = vdwg.mxu0
        %v585 = vadd.f32 %v564, %v582
        %v586 = vxor.u32 %v585, 2147483648
        %v587 = vmul.f32 %v586, 1.442695
        %v588 = vpow.pop %v587
        %v589 = vadd.f32 %v588, 1.0
        %v590 = vrcp.pop %v589
        %v591 = vmul.f32 %v589, %v590
        %v592 = vsub.f32 1.0, %v591
        %v593 = vmul.f32 %v590, %v592
        %v594 = vadd.f32 %v590, %v593
        %vm595 = vweird.f32 %v589
        %vm596 = vweird.f32 %v590
        %vm597 = vmor %vm595, %vm596
        %v598 = vsel %vm597, %v590, %v594
        %v599 = vand.u32 2147483647, %v589
        %vm600 = vcmp.eq.f32.partialorder %v599, 8.507059e+37
        %v601 = vand.u32 %v589, 2147483648
        %v602 = vor.u32 1.1754944e-38, %v601
        %v603 = vsel %vm600, %v602, %v598
        %v604 = vmul.f32 1.0, %v603
        %v605 = vtanh.pop %v585
        %v606 = vmul.f32 %v604, %v548
        %608 = vrot.lane.b32.xlu0 %v605, 64
        %v609 = vpop.permute.xlu0 %608
        %v611 = vmul.f32 %v604, %v609
        %613 = vrot.lane.b32.xlu0 %v611, 32
        %v614 = vpop.permute.xlu0 %613
        %v616 = vadd.f32 %v606, %v614
        %v617 = vtanh.pop %v616
        %619 = vrot.lane.b32.xlu0 %v617, 64
        %v620 = vpop.permute.xlu0 %619
        %v622 = vmul.f32 %v604, %v620
        %624 = vrot.lane.b32.xlu0 %v622, 32
        %v625 = vpop.permute.xlu0 %624
        %s627 = scalar_lea.vmem %s301, %s562 [#allocation9]
        %628 = vst.msk [vmem:[%s627] sm:$0x3] %vm421, %v625
        %s629 = ssub.s32 4, %s32
        %s630 = smul.u32 %s629, 2
        %s631 = scalar_lea.vmem %s265, %s630 [#allocation4]
        %v632 = vld [vmem:[%s631] sm:$0x3]
        %v633 = vpack.c.bf16 %v622, %v622
        %635 = vrot.lane.b32.xlu0 %v633, 32
        %v636 = vpop.permute.xlu0 %635
        %v638 = vsel %vm357, %v636, 0
        %640 = vmatpush.bf16.msra.mxu0 0
        %641 = vmatpush.bf16.msra.mxu0 0
        %642 = vmatpush.bf16.msra.mxu0 0
        %643 = vmatpush.bf16.msra.mxu0 0
        %644 = vmatpush.bf16.msra.mxu0 0
        %645 = vmatpush.bf16.msra.mxu0 0
        %646 = vmatpush.bf16.msra.mxu0 %v354
        %647 = vmatpush.bf16.msra.mxu0 %v353
        %648 = vmatmul.bf16.gmra.mxu0 %v638
        %v649 = vpop.f32.mrf.mxu0
        %v650 = vadd.f32 0.0, %v649
        %v651 = vpop.f32.mrf.mxu0
        %652 = vdwg.mxu0
        %v653 = vadd.f32 %v632, %v650
        %v654 = vxor.u32 %v653, 2147483648
        %v655 = vmul.f32 %v654, 1.442695
        %v656 = vpow.pop %v655
        %v657 = vadd.f32 %v656, 1.0
        %v658 = vrcp.pop %v657
        %v659 = vmul.f32 %v657, %v658
        %v660 = vsub.f32 1.0, %v659
        %v661 = vmul.f32 %v658, %v660
        %v662 = vadd.f32 %v658, %v661
        %vm663 = vweird.f32 %v657
        %vm664 = vweird.f32 %v658
        %vm665 = vmor %vm663, %vm664
        %v666 = vsel %vm665, %v658, %v662
        %v667 = vand.u32 2147483647, %v657
        %vm668 = vcmp.eq.f32.partialorder %v667, 8.507059e+37
        %v669 = vand.u32 %v657, 2147483648
        %v670 = vor.u32 1.1754944e-38, %v669
        %v671 = vsel %vm668, %v670, %v666
        %v672 = vmul.f32 1.0, %v671
        %v673 = vtanh.pop %v653
        %v674 = vmul.f32 %v672, %v616
        %676 = vrot.lane.b32.xlu0 %v673, 64
        %v677 = vpop.permute.xlu0 %676
        %v679 = vmul.f32 %v672, %v677
        %681 = vrot.lane.b32.xlu0 %v679, 32
        %v682 = vpop.permute.xlu0 %681
        %v684 = vadd.f32 %v674, %v682
        %v685 = vtanh.pop %v684
        %687 = vrot.lane.b32.xlu0 %v685, 64
        %v688 = vpop.permute.xlu0 %687
        %v690 = vmul.f32 %v672, %v688
        %692 = vrot.lane.b32.xlu0 %v690, 32
        %v693 = vpop.permute.xlu0 %692
        %s695 = scalar_lea.vmem %s301, %s630 [#allocation9]
        %696 = vst.msk [vmem:[%s695] sm:$0x3] %vm421, %v693
        %s697 = smul.u32 %s32, 4294967293
        %s698 = sadd.s32 %s697, 5
        %s699 = smul.u32 %s698, 2
        %s700 = scalar_lea.vmem %s265, %s699 [#allocation4]
        %v701 = vld [vmem:[%s700] sm:$0x3]
        %v702 = vpack.c.bf16 %v690, %v690
        %704 = vrot.lane.b32.xlu0 %v702, 32
        %v705 = vpop.permute.xlu0 %704
        %v707 = vsel %vm357, %v705, 0
        %709 = vmatpush.bf16.msra.mxu0 0
        %710 = vmatpush.bf16.msra.mxu0 0
        %711 = vmatpush.bf16.msra.mxu0 0
        %712 = vmatpush.bf16.msra.mxu0 0
        %713 = vmatpush.bf16.msra.mxu0 0
        %714 = vmatpush.bf16.msra.mxu0 0
        %715 = vmatpush.bf16.msra.mxu0 %v354
        %716 = vmatpush.bf16.msra.mxu0 %v353
        %717 = vmatmul.bf16.gmra.mxu0 %v707
        %v718 = vpop.f32.mrf.mxu0
        %v719 = vadd.f32 0.0, %v718
        %v720 = vpop.f32.mrf.mxu0
        %721 = vdwg.mxu0
        %v722 = vadd.f32 %v701, %v719
        %v723 = vxor.u32 %v722, 2147483648
        %v724 = vmul.f32 %v723, 1.442695
        %v725 = vpow.pop %v724
        %v726 = vadd.f32 %v725, 1.0
        %v727 = vrcp.pop %v726
        %v728 = vmul.f32 %v726, %v727
        %v729 = vsub.f32 1.0, %v728
        %v730 = vmul.f32 %v727, %v729
        %v731 = vadd.f32 %v727, %v730
        %vm732 = vweird.f32 %v726
        %vm733 = vweird.f32 %v727
        %vm734 = vmor %vm732, %vm733
        %v735 = vsel %vm734, %v727, %v731
        %v736 = vand.u32 2147483647, %v726
        %vm737 = vcmp.eq.f32.partialorder %v736, 8.507059e+37
        %v738 = vand.u32 %v726, 2147483648
        %v739 = vor.u32 1.1754944e-38, %v738
        %v740 = vsel %vm737, %v739, %v735
        %v741 = vmul.f32 1.0, %v740
        %v742 = vtanh.pop %v722
        %v743 = vmul.f32 %v741, %v684
        %745 = vrot.lane.b32.xlu0 %v742, 64
        %v746 = vpop.permute.xlu0 %745
        %v748 = vmul.f32 %v741, %v746
        %750 = vrot.lane.b32.xlu0 %v748, 32
        %v751 = vpop.permute.xlu0 %750
        %v753 = vadd.f32 %v743, %v751
        %v754 = vtanh.pop %v753
        %756 = vrot.lane.b32.xlu0 %v754, 64
        %v757 = vpop.permute.xlu0 %756
        %v759 = vmul.f32 %v741, %v757
        %761 = vrot.lane.b32.xlu0 %v759, 32
        %v762 = vpop.permute.xlu0 %761
        %s764 = scalar_lea.vmem %s301, %s699 [#allocation9]
        %765 = vst.msk [vmem:[%s764] sm:$0x3] %vm421, %v762
        %s766 = smul.u32 %s32, 4294967291
        %s767 = sadd.s32 %s766, 6
        %s768 = smul.u32 %s767, 2
        %s769 = scalar_lea.vmem %s265, %s768 [#allocation4]
        %v770 = vld [vmem:[%s769] sm:$0x3]
        %v771 = vpack.c.bf16 %v759, %v759
        %773 = vrot.lane.b32.xlu0 %v771, 32
        %v774 = vpop.permute.xlu0 %773
        %v776 = vsel %vm357, %v774, 0
        %778 = vmatpush.bf16.msra.mxu0 0
        %779 = vmatpush.bf16.msra.mxu0 0
        %780 = vmatpush.bf16.msra.mxu0 0
        %781 = vmatpush.bf16.msra.mxu0 0
        %782 = vmatpush.bf16.msra.mxu0 0
        %783 = vmatpush.bf16.msra.mxu0 0
        %784 = vmatpush.bf16.msra.mxu0 %v354
        %785 = vmatpush.bf16.msra.mxu0 %v353
        %786 = vmatmul.bf16.gmra.mxu0 %v776
        %v787 = vpop.f32.mrf.mxu0
        %v788 = vadd.f32 0.0, %v787
        %v789 = vpop.f32.mrf.mxu0
        %790 = vdwg.mxu0
        %v791 = vadd.f32 %v770, %v788
        %v792 = vxor.u32 %v791, 2147483648
        %v793 = vmul.f32 %v792, 1.442695
        %v794 = vpow.pop %v793
        %v795 = vadd.f32 %v794, 1.0
        %v796 = vrcp.pop %v795
        %v797 = vmul.f32 %v795, %v796
        %v798 = vsub.f32 1.0, %v797
        %v799 = vmul.f32 %v796, %v798
        %v800 = vadd.f32 %v796, %v799
        %vm801 = vweird.f32 %v795
        %vm802 = vweird.f32 %v796
        %vm803 = vmor %vm801, %vm802
        %v804 = vsel %vm803, %v796, %v800
        %v805 = vand.u32 2147483647, %v795
        %vm806 = vcmp.eq.f32.partialorder %v805, 8.507059e+37
        %v807 = vand.u32 %v795, 2147483648
        %v808 = vor.u32 1.1754944e-38, %v807
        %v809 = vsel %vm806, %v808, %v804
        %v810 = vmul.f32 1.0, %v809
        %v811 = vtanh.pop %v791
        %v812 = vmul.f32 %v810, %v753
        %814 = vrot.lane.b32.xlu0 %v811, 64
        %v815 = vpop.permute.xlu0 %814
        %v817 = vmul.f32 %v810, %v815
        %819 = vrot.lane.b32.xlu0 %v817, 32
        %v820 = vpop.permute.xlu0 %819
        %v822 = vadd.f32 %v812, %v820
        %v823 = vtanh.pop %v822
        %825 = vrot.lane.b32.xlu0 %v823, 64
        %v826 = vpop.permute.xlu0 %825
        %v828 = vmul.f32 %v810, %v826
        %830 = vrot.lane.b32.xlu0 %v828, 32
        %v831 = vpop.permute.xlu0 %830
        %s833 = scalar_lea.vmem %s301, %s768 [#allocation9]
        %834 = vst.msk [vmem:[%s833] sm:$0x3] %vm421, %v831
        %s835 = smul.u32 %s32, 4294967289
        %s836 = sadd.s32 %s835, 7
        %s837 = smul.u32 %s836, 2
        %s838 = scalar_lea.vmem %s265, %s837 [#allocation4]
        %v839 = vld [vmem:[%s838] sm:$0x3]
        %v840 = vpack.c.bf16 %v828, %v828
        %842 = vrot.lane.b32.xlu0 %v840, 32
        %v843 = vpop.permute.xlu0 %842
        %v845 = vsel %vm357, %v843, 0
        %847 = vmatpush.bf16.msra.mxu0 0
        %848 = vmatpush.bf16.msra.mxu0 0
        %849 = vmatpush.bf16.msra.mxu0 0
        %850 = vmatpush.bf16.msra.mxu0 0
        %851 = vmatpush.bf16.msra.mxu0 0
        %852 = vmatpush.bf16.msra.mxu0 0
        %853 = vmatpush.bf16.msra.mxu0 %v354
        %854 = vmatpush.bf16.msra.mxu0 %v353
        %855 = vmatmul.bf16.gmra.mxu0 %v845
        %v856 = vpop.f32.mrf.mxu0
        %v857 = vadd.f32 0.0, %v856
        %v858 = vpop.f32.mrf.mxu0
        %859 = vdwg.mxu0
        %v860 = vadd.f32 %v839, %v857
        %v861 = vxor.u32 %v860, 2147483648
        %v862 = vmul.f32 %v861, 1.442695
        %v863 = vpow.pop %v862
        %v864 = vadd.f32 %v863, 1.0
        %v865 = vrcp.pop %v864
        %v866 = vmul.f32 %v864, %v865
        %v867 = vsub.f32 1.0, %v866
        %v868 = vmul.f32 %v865, %v867
        %v869 = vadd.f32 %v865, %v868
        %vm870 = vweird.f32 %v864
        %vm871 = vweird.f32 %v865
        %vm872 = vmor %vm870, %vm871
        %v873 = vsel %vm872, %v865, %v869
        %v874 = vand.u32 2147483647, %v864
        %vm875 = vcmp.eq.f32.partialorder %v874, 8.507059e+37
        %v876 = vand.u32 %v864, 2147483648
        %v877 = vor.u32 1.1754944e-38, %v876
        %v878 = vsel %vm875, %v877, %v873
        %v879 = vmul.f32 1.0, %v878
        %v880 = vtanh.pop %v860
        %v881 = vmul.f32 %v879, %v822
        %883 = vrot.lane.b32.xlu0 %v880, 64
        %v884 = vpop.permute.xlu0 %883
        %v886 = vmul.f32 %v879, %v884
        %888 = vrot.lane.b32.xlu0 %v886, 32
        %v889 = vpop.permute.xlu0 %888
        %v891 = vadd.f32 %v881, %v889
        %v892 = vtanh.pop %v891
        %894 = vrot.lane.b32.xlu0 %v892, 64
        %v895 = vpop.permute.xlu0 %894
        %v897 = vmul.f32 %v879, %v895
        %899 = vrot.lane.b32.xlu0 %v897, 32
        %v900 = vpop.permute.xlu0 %899
        %s902 = scalar_lea.vmem %s301, %s837 [#allocation9]
        %903 = vst.msk [vmem:[%s902] sm:$0x3] %vm421, %v900
        %904 = vst.msk [vmem:[#allocation2] sm:$0x3] %vm421, %v900
        %906 = vrot.lane.b32.xlu0 %v891, 96
        %v907 = vpop.permute.xlu0 %906
        %909 = vst.msk [vmem:[#allocation3] sm:$0x3] %vm421, %v907
        // Predicated region
        $region41: #{tpu_custom_call.1} parent=27 // pred_check
          %p910 = pneg %p327
        $region42: #{tpu_custom_call.1} parent=27 // pred_check_branch
          %912 = sbr.rel (%p910) target = $region44
        $region43: #{tpu_custom_call.1} parent=27 // pred_region
          %913 = vst.msk [vmem:[%s308] sm:$0x3] %vm421, %v900
          %914 = vst.msk [vmem:[%s315] sm:$0x3] %vm421, %v907
        $region44: #{tpu_custom_call.1} parent=27 // pred_fallthru
          _
        %s915 = sand.u32 %s120, 1
        %s916 = scalar_lea.sflag [#allocation6], %s915
        %s917 = sand.u32 %s120, 1
        %s918 = smul.addr %s917, 16
        %s919 = scalar_lea.vmem [#allocation9], %s918
        %s920 = sand.u32 %s28, 1
        %s921 = scalar_lea.sflag [#allocation11], %s920
        %s922 = sand.u32 %s146, 1
        %s923 = smul.addr %s922, 2
        %s924 = scalar_lea.vmem [#allocation10], %s923
        %s925 = sand.u32 %s28, 1
        %s926 = scalar_lea.sflag [#allocation11], %s925
        %s927 = sand.u32 %s172, 1
        %s928 = smul.addr %s927, 2
        %s929 = scalar_lea.vmem [#allocation12], %s928
        // Predicated region
        $region45: #{tpu_custom_call.1} parent=27 // pred_check
          %p930 = pneg %p130
        $region46: #{tpu_custom_call.1} parent=27 // pred_check_branch
          %932 = sbr.rel (%p930) target = $region48
        $region47: #{tpu_custom_call.1} parent=27 // pred_region
          %s933 = smul.u32 %s33, 2
          %s934 = ssub.s32 0, %s933
          %s935 = smul.u32 %s32, %s934
          %s936 = sadd.s32 %s33, %s935
          %s937 = smul.u32 8, %s936
          %939 = vsyncadd %s916, 0
          %s940 = smul.addr %s32, 8
          %s941 = sadd.s32 %s937, %s940
          %s942 = smul.addr %s941, 2
          %s943 = scalar_lea.hbm %s2, %s942
          %s944 = sshll.u32 %s919, 4
          %s945 = int_to_ptr.vmem [resolvable:$true] %s944
          %s946 = sshll.u32 %s943, 4
          %s947 = int_to_ptr.hbm [resolvable:$true] %s946
          %952 = dma.vmem_to_hbm [thread:$0]  %s945, 256, %s947, %s916, 32, 32, 2
        $region48: #{tpu_custom_call.1} parent=27 // pred_fallthru
          _
        // Predicated region
        $region49: #{tpu_custom_call.1} parent=27 // pred_check
          %p953 = pneg %p156
        $region50: #{tpu_custom_call.1} parent=27 // pred_check_branch
          %955 = sbr.rel (%p953) target = $region52
        $region51: #{tpu_custom_call.1} parent=27 // pred_region
          %957 = vsyncadd %s921, 0
          %s958 = smul.addr %s32, 2
          %s959 = scalar_lea.hbm %s3, %s958
          %s961 = sshll.u32 %s924, 4
          %s962 = int_to_ptr.vmem [resolvable:$true] %s961
          %s963 = sshll.u32 %s959, 4
          %s964 = int_to_ptr.hbm [resolvable:$true] %s963
          %966 = dma.vmem_to_hbm [thread:$0]  %s962, 32, %s964, %s921
        $region52: #{tpu_custom_call.1} parent=27 // pred_fallthru
          _
        // Predicated region
        $region53: #{tpu_custom_call.1} parent=27 // pred_check
          %p967 = pneg %p182
        $region54: #{tpu_custom_call.1} parent=27 // pred_check_branch
          %969 = sbr.rel (%p967) target = $region56
        $region55: #{tpu_custom_call.1} parent=27 // pred_region
          %971 = vsyncadd %s926, 0
          %s972 = smul.addr %s32, 2
          %s973 = scalar_lea.hbm %s4, %s972
          %s975 = sshll.u32 %s929, 4
          %s976 = int_to_ptr.vmem [resolvable:$true] %s975
          %s977 = sshll.u32 %s973, 4
          %s978 = int_to_ptr.hbm [resolvable:$true] %s977
          %980 = dma.vmem_to_hbm [thread:$0]  %s976, 32, %s978, %s926
        $region56: #{tpu_custom_call.1} parent=27 // pred_fallthru
          _
      $region28: #{tpu_custom_call.1} parent=5 // pred_fallthru
        _
      %p981 = scmp.le.s32.totalorder 2, %s23
      // Predicated region
      $region57: #{tpu_custom_call.1} parent=5 // pred_check
        %p982 = pneg %p981
      $region58: #{tpu_custom_call.1} parent=5 // pred_check_branch
        %984 = sbr.rel (%p982) target = $region60
      $region59: #{tpu_custom_call.1} parent=5 // pred_region
        %s985 = ssub.s32 %s23, 2
        // Predicated region
        $region61: #{tpu_custom_call.1} parent=59 // pred_check
          %p986 = pneg %p136
        $region62: #{tpu_custom_call.1} parent=59 // pred_check_branch
          %988 = sbr.rel (%p986) target = $region64
        $region63: #{tpu_custom_call.1} parent=59 // pred_region
          %s989 = sand.u32 %s121, 1
          %s990 = scalar_lea.sflag [#allocation6], %s989
          %s991 = sand.u32 %s121, 1
          %s992 = smul.addr %s991, 16
          %s993 = scalar_lea.vmem [#allocation9], %s992
          %995 = dma.done %s990, 256
        $region64: #{tpu_custom_call.1} parent=59 // pred_fallthru
          _
        // Predicated region
        $region65: #{tpu_custom_call.1} parent=59 // pred_check
          %p996 = pneg %p162
        $region66: #{tpu_custom_call.1} parent=59 // pred_check_branch
          %998 = sbr.rel (%p996) target = $region68
        $region67: #{tpu_custom_call.1} parent=59 // pred_region
          %s999 = sand.u32 %s29, 1
          %s1000 = scalar_lea.sflag [#allocation11], %s999
          %s1001 = sand.u32 %s147, 1
          %s1002 = smul.addr %s1001, 2
          %s1003 = scalar_lea.vmem [#allocation10], %s1002
          %1005 = dma.done %s1000, 32
        $region68: #{tpu_custom_call.1} parent=59 // pred_fallthru
          _
        // Predicated region
        $region69: #{tpu_custom_call.1} parent=59 // pred_check
          %p1006 = pneg %p188
        $region70: #{tpu_custom_call.1} parent=59 // pred_check_branch
          %1008 = sbr.rel (%p1006) target = $region72
        $region71: #{tpu_custom_call.1} parent=59 // pred_region
          %s1009 = sand.u32 %s29, 1
          %s1010 = scalar_lea.sflag [#allocation11], %s1009
          %s1011 = sand.u32 %s173, 1
          %s1012 = smul.addr %s1011, 2
          %s1013 = scalar_lea.vmem [#allocation12], %s1012
          %1015 = dma.done %s1010, 32
        $region72: #{tpu_custom_call.1} parent=59 // pred_fallthru
          _
      $region60: #{tpu_custom_call.1} parent=5 // pred_fallthru
        _
    $region6: #{tpu_custom_call.1} parent=1 // loop_footer
      %s27 = sadd.s32 1, %s23
    $region7: #{tpu_custom_call.1} parent=1 // loop_footer_branch
      %22 = sbr.rel target = $region3
    $region8: #{tpu_custom_call.1} parent=1 // loop_exit
      _
    %1016 = vsyncpa [#allocation5], 1
    %s1017 = scalar_lea.sflag [#allocation5], 1
    %1018 = vsyncpa %s1017, 1
    %1019 = vsyncpa [#allocation8], 1
    %s1020 = scalar_lea.sflag [#allocation8], 1
    %1021 = vsyncpa %s1020, 1
    %1022 = vsyncpa [#allocation6], 1
    %s1023 = scalar_lea.sflag [#allocation6], 1
    %1024 = vsyncpa %s1023, 1
    %1025 = vsyncpa [#allocation11], 1
    %s1026 = scalar_lea.sflag [#allocation11], 1
    %1027 = vsyncpa %s1026, 1

</llo_original>
